<compile_context>
chip_gen: v7x
topology: tpu7x:2x2x1
jax: 0.10.0
libtpu: 0.0.40
codegen_flags: <defaults>
</compile_context>

<pallas_src>
import functools

import jax
import jax.numpy as jnp
from jax.experimental import pallas as pl
from jax.experimental.pallas import tpu as pltpu

VMEM = pl.BlockSpec(memory_space=pltpu.MemorySpace.VMEM)


def _round_up(x, m):
    return ((x + m - 1) // m) * m


def _edge_tile_cap():
    """Generation-aware edge-tile cap (bigger on 128 MiB VMEM parts)."""
    try:
        kind = jax.devices()[0].device_kind.lower()
    except Exception:
        kind = ""
    if ("v6" in kind) or ("v5 lite" in kind) or ("v5e" in kind) or ("v5litepod" in kind):
        return 2048          # v5e / v6e: 128 MiB physical VMEM
    return 1024              # v7x (64 MiB) / unknown: tighter


# ------------- layer-1: fused node_emb + LayerNorm + W projection ---------- #

def _embed_project_kernel(nf_ref, ew_ref, eb_ref, g_ref, b_ref, w_ref, wh_ref):
    # node_emb is Linear(1, in_dim): a K=1 matmul == VPU broadcast multiply.
    x = nf_ref[...] * ew_ref[...] + eb_ref[...]               # [t,1]*[1,D]->[t,D]
    mu = jnp.mean(x, axis=-1, keepdims=True)
    var = jnp.mean((x - mu) ** 2, axis=-1, keepdims=True)
    x = (x - mu) * jax.lax.rsqrt(var + 1e-5) * g_ref[...] + b_ref[...]
    wh = jnp.dot(x, w_ref[...], preferred_element_type=jnp.float32)
    wh_ref[...] = wh.astype(jnp.bfloat16)       # bf16 at rest halves HBM bytes


def embed_project(nf_pad, emb_w, emb_b, g, b, W, tile):
    n_pad = nf_pad.shape[0]
    in_dim, hf = W.shape
    return pl.pallas_call(
        _embed_project_kernel,
        out_shape=jax.ShapeDtypeStruct((n_pad, hf), jnp.bfloat16),
        grid=(n_pad // tile,),
        in_specs=[
            pl.BlockSpec((tile, 1), lambda i: (i, 0)),
            pl.BlockSpec((1, in_dim), lambda i: (0, 0)),
            pl.BlockSpec((1, in_dim), lambda i: (0, 0)),
            pl.BlockSpec((1, in_dim), lambda i: (0, 0)),
            pl.BlockSpec((1, in_dim), lambda i: (0, 0)),
            pl.BlockSpec((in_dim, hf), lambda i: (0, 0)),
        ],
        out_specs=pl.BlockSpec((tile, hf), lambda i: (i, 0)),
        compiler_params=pltpu.CompilerParams(dimension_semantics=("parallel",)),
    )(nf_pad, emb_w.reshape(1, in_dim), emb_b.reshape(1, in_dim),
      g.reshape(1, in_dim), b.reshape(1, in_dim), W)


# --------------------------- layer-2 W projection --------------------------- #

def _project_kernel(x_ref, w_ref, wh_ref):
    wh = jnp.dot(x_ref[...], w_ref[...], preferred_element_type=jnp.float32)
    wh_ref[...] = wh.astype(jnp.bfloat16)


def project(x_pad, W, tile):
    n_pad, in_dim = x_pad.shape
    hf = W.shape[1]
    return pl.pallas_call(
        _project_kernel,
        out_shape=jax.ShapeDtypeStruct((n_pad, hf), jnp.bfloat16),
        grid=(n_pad // tile,),
        in_specs=[pl.BlockSpec((tile, in_dim), lambda i: (i, 0)),
                  pl.BlockSpec((in_dim, hf), lambda i: (0, 0))],
        out_specs=pl.BlockSpec((tile, hf), lambda i: (i, 0)),
        compiler_params=pltpu.CompilerParams(dimension_semantics=("parallel",)),
    )(x_pad, W)


# ---- fused message + scatter-add + bias + head-mean + LayerNorm + ReLU ---- #
# Edges are sorted by dst; per-node-tile edge-tile (offset, count) arrays are
# scalar-prefetched so each node tile only walks its own contiguous edge
# range.  Grid steps past the range clamp the block index (DMA elided) and
# skip compute via pl.when.

def _gat_aggregate_kernel(off_ref, cnt_ref, dst_ref, alpha_ref, whs_ref,
                          exp_ref, hm_ref, bias_ref, g_ref, b_ref,
                          o_ref, acc_ref, *, tile_n):
    n = pl.program_id(0)
    k = pl.program_id(1)

    @pl.when(k == 0)
    def _():
        acc_ref[...] = jnp.zeros_like(acc_ref)

    @pl.when(k < cnt_ref[n])
    def _():
        tk = alpha_ref.shape[0]
        dst = dst_ref[...]                              # [1, tk] int32 (-1 = pad)
        # per-edge message: alpha expanded per head (indicator matmul) * Wh_src
        alpha_exp = jnp.dot(alpha_ref[...], exp_ref[...],
                            preferred_element_type=jnp.float32)        # [tk, H*F]
        msg = (alpha_exp * whs_ref[...].astype(jnp.float32)).astype(jnp.bfloat16)
        # scatter-add by dst with an in-kernel one-hot over this node tile only
        row_node = (jax.lax.broadcasted_iota(jnp.int32, (tile_n, tk), 0)
                    + n * tile_n)
        onehot = jnp.where(row_node == dst, 1.0, 0.0).astype(jnp.bfloat16)
        acc_ref[...] += jnp.dot(onehot, msg, preferred_element_type=jnp.float32)

    # Epilogue: bias + head-mean + LayerNorm + ReLU on the last edge step.
    @pl.when(k == pl.num_programs(1) - 1)
    def _():
        hp = acc_ref[...] + bias_ref[...]                              # [tile_n, H*F]
        h = jnp.dot(hp, hm_ref[...], preferred_element_type=jnp.float32)  # head mean
        mu = jnp.mean(h, axis=-1, keepdims=True)
        var = jnp.mean((h - mu) ** 2, axis=-1, keepdims=True)
        y = (h - mu) * jax.lax.rsqrt(var + 1e-5)
        y = y * g_ref[...] + b_ref[...]
        o_ref[...] = jnp.maximum(y, 0.0)


def gat_aggregate(off, cnt, dst_p, alpha_p, whs_p, expander, head_mean,
                  bias, ln_g, ln_b, out_f, tile_n, tile_e, n_pad):
    e_pad, hf = whs_p.shape
    n_heads = alpha_p.shape[1]
    n_tiles = n_pad // tile_n
    e_tiles = e_pad // tile_e

    def eblk(n, k, off_ref, cnt_ref):
        # clamp into this node tile's own edge-tile range; repeated indices
        # (k >= cnt) skip the DMA and the compute is gated off in-kernel.
        return off_ref[n] + jnp.minimum(k, jnp.maximum(cnt_ref[n] - 1, 0))

    kernel = functools.partial(_gat_aggregate_kernel, tile_n=tile_n)
    return pl.pallas_call(
        kernel,
        out_shape=jax.ShapeDtypeStruct((n_pad, out_f), jnp.float32),
        grid_spec=pltpu.PrefetchScalarGridSpec(
            num_scalar_prefetch=2,
            grid=(n_tiles, e_tiles),
            in_specs=[
                pl.BlockSpec((1, tile_e),
                             lambda n, k, o, c: (0, eblk(n, k, o, c))),        # dst
                pl.BlockSpec((tile_e, n_heads),
                             lambda n, k, o, c: (eblk(n, k, o, c), 0)),        # alpha
                pl.BlockSpec((tile_e, hf),
                             lambda n, k, o, c: (eblk(n, k, o, c), 0)),        # Wh_src
                pl.BlockSpec((n_heads, hf), lambda n, k, o, c: (0, 0)),        # expander
                pl.BlockSpec((hf, out_f), lambda n, k, o, c: (0, 0)),          # head mean
                pl.BlockSpec((1, hf), lambda n, k, o, c: (0, 0)),              # bias
                pl.BlockSpec((1, out_f), lambda n, k, o, c: (0, 0)),           # LN gamma
                pl.BlockSpec((1, out_f), lambda n, k, o, c: (0, 0)),           # LN beta
            ],
            out_specs=pl.BlockSpec((tile_n, out_f), lambda n, k, o, c: (n, 0)),
            scratch_shapes=[pltpu.VMEM((tile_n, hf), jnp.float32)],
        ),
        compiler_params=pltpu.CompilerParams(
            dimension_semantics=("parallel", "arbitrary"),
            vmem_limit_bytes=48 * 1024 * 1024),
    )(off, cnt, dst_p, alpha_p, whs_p, expander, head_mean,
      bias.reshape(1, hf), ln_g.reshape(1, out_f), ln_b.reshape(1, out_f))


# ------------------------------ fused MLP head ------------------------------ #

def _mlp_kernel(x_ref, w1_ref, b1_ref, w2_ref, b2_ref, w3_ref, b3_ref, o_ref):
    y = jnp.dot(x_ref[...], w1_ref[...], preferred_element_type=jnp.float32) + b1_ref[...]
    y = jnp.maximum(y, 0.0)
    y = jnp.dot(y, w2_ref[...], preferred_element_type=jnp.float32) + b2_ref[...]
    y = jnp.maximum(y, 0.0)
    o_ref[...] = jnp.dot(y, w3_ref[...], preferred_element_type=jnp.float32) + b3_ref[...]


def mlp_head(x, w1, b1, w2, b2, w3, b3):
    B = x.shape[0]
    out_dim = w3.shape[1]
    return pl.pallas_call(
        _mlp_kernel,
        out_shape=jax.ShapeDtypeStruct((B, out_dim), jnp.float32),
        in_specs=[VMEM] * 7,
        out_specs=VMEM,
    )(x, w1, b1.reshape(1, -1), w2, b2.reshape(1, -1), w3, b3.reshape(1, -1))


# ------------------------------ model pieces ------------------------------- #

def gat_layer(wh_bf16, src, dst, A_cat, bias, ln_g, ln_b, expander, head_mean,
              n_heads, out_f, num_nodes, n_pad, tile_n, tile_e, neg_slope=0.2):
    H = n_heads

    # attention logits per node: tiny [n_pad,128]@[128,8] matmul in the
    # wrapper (avoids an 8-lane-wide kernel output / masked partial stores)
    att = jnp.dot(wh_bf16.astype(jnp.float32), A_cat)        # [n_pad, 2H]
    att_src, att_dst = att[:, :H], att[:, H:]

    # sort edges by dst so each node tile sees a contiguous edge range
    order = jnp.argsort(dst)
    src_s = src[order].astype(jnp.int32)
    dst_s = dst[order].astype(jnp.int32)

    # TODO(synk): segment softmax over dst (irregular) stays in plain JAX.
    e = att_src[src_s] + att_dst[dst_s]                       # [E, H]
    e = jnp.where(e > 0, e, neg_slope * e)                    # LeakyReLU(0.2)
    # self-loops guarantee every dst segment is non-empty (segment_max safe)
    e_max = jax.ops.segment_max(e, dst_s, num_segments=num_nodes)
    e = jnp.exp(e - e_max[dst_s])
    denom = jax.ops.segment_sum(e, dst_s, num_segments=num_nodes)
    alpha = e / denom[dst_s]                                  # [E, H]
    # attention dropout: identity (eval mode)

    # TODO(synk): irregular Wh row gather done with an XLA gather; a manual
    # in-kernel DMA gather (scalar-prefetched src indices) could fuse it.
    wh_src = wh_bf16[src_s]                                   # [E, H*F] bf16

    E = src_s.shape[0]
    e_pad = _round_up(E, tile_e)
    pad = e_pad - E
    dst_p = jnp.pad(dst_s, (0, pad), constant_values=-1).reshape(1, e_pad)
    alpha_p = jnp.pad(alpha, ((0, pad), (0, 0)))
    whs_p = jnp.pad(wh_src, ((0, pad), (0, 0)))

    # per-node-tile edge-tile offsets / counts (scalar-prefetched)
    n_tiles = n_pad // tile_n
    bounds = jnp.arange(n_tiles + 1, dtype=jnp.int32) * tile_n
    pos = jnp.searchsorted(dst_s, bounds, side='left').astype(jnp.int32)
    lo, hi = pos[:-1], pos[1:]
    off = (lo // tile_e).astype(jnp.int32)
    last = (jnp.maximum(hi - 1, 0) // tile_e).astype(jnp.int32)
    cnt = jnp.where(hi > lo, last - off + 1, 0).astype(jnp.int32)

    return gat_aggregate(off, cnt, dst_p, alpha_p, whs_p, expander, head_mean,
                         bias, ln_g, ln_b, out_f, tile_n, tile_e, n_pad)


@functools.partial(jax.jit, static_argnums=(3, 4, 5, 6, 7))
def gat_edge_model_forward(params, edge_index, batch, num_nodes, num_graphs,
                           n_heads, hidden_dim, tile_e_cap):
    # neighborhood features (irregular segment ops, plain JAX — matches spec)
    row, col = edge_index[0], edge_index[1]
    ones = jnp.ones(col.shape, jnp.float32)
    deg = jax.ops.segment_sum(ones, col, num_segments=num_nodes)
    neighbor_degrees = deg[row]
    summed = jax.ops.segment_sum(neighbor_degrees, row, num_segments=num_nodes)
    nf = (summed / jnp.maximum(deg, 1.0))[:, None]                     # [N, 1]

    # node tiling (project tile can be larger: its per-tile VMEM is tiny)
    if num_nodes > 512:
        tile_n, n_pad, tile_p = 256, _round_up(num_nodes, 512), 512
    else:
        tile_n = _round_up(num_nodes, 8)
        n_pad = tile_n
        tile_p = tile_n
    nf_pad = jnp.pad(nf, ((0, n_pad - num_nodes), (0, 0)))

    # add self loops
    loops = jnp.arange(num_nodes, dtype=edge_index.dtype)
    ei = jnp.concatenate([edge_index, jnp.stack([loops, loops])], axis=1)
    src, dst = ei[0], ei[1]
    E = src.shape[0]
    tile_e = min(tile_e_cap, _round_up(E, 128))

    expander, head_mean = params["expander"], params["head_mean"]

    # layer 1: fused embed + LN + projection, then softmax + fused aggregate
    wh1 = embed_project(nf_pad, params["emb_W"], params["emb_b"],
                        params["ln_in_g"], params["ln_in_b"],
                        params["gat1"]["W"], tile_p)
    h1 = gat_layer(wh1, src, dst, params["gat1"]["A_cat"], params["gat1"]["bias"],
                   params["ln1_g"], params["ln1_b"], expander, head_mean,
                   n_heads, hidden_dim, num_nodes, n_pad, tile_n, tile_e)

    # layer 2
    wh2 = project(h1, params["gat2"]["W"], tile_p)
    h2 = gat_layer(wh2, src, dst, params["gat2"]["A_cat"], params["gat2"]["bias"],
                   params["ln2_g"], params["ln2_b"], expander, head_mean,
                   n_heads, hidden_dim, num_nodes, n_pad, tile_n, tile_e)

    # JumpingKnowledge 'cat'
    h = jnp.concatenate([h1[:num_nodes], h2[:num_nodes]], axis=-1)

    # global_mean_pool: tiny B -> plain segment_sum (no dense pool matrix)
    counts = jax.ops.segment_sum(jnp.ones((num_nodes,), jnp.float32), batch,
                                 num_segments=num_graphs)
    sums = jax.ops.segment_sum(h, batch, num_segments=num_graphs)
    pooled = sums / jnp.maximum(counts, 1.0)[:, None]

    # fused 3-layer MLP head (dropouts are identity in eval mode)
    return mlp_head(pooled, params["mlp_W1"], params["mlp_b1"],
                    params["mlp_W2"], params["mlp_b2"],
                    params["mlp_W3"], params["mlp_b3"])


# ------------------------------ param init --------------------------------- #

def xavier_uniform(key, shape):
    fan_in, fan_out = shape[0], shape[1]
    bound = jnp.sqrt(6.0 / (fan_in + fan_out))
    return jax.random.uniform(key, shape, jnp.float32, -bound, bound)


def make_gat_params(key, in_features, out_features, n_heads):
    H, F = n_heads, out_features
    k1, k2 = jax.random.split(key)
    W = xavier_uniform(k1, (in_features, H * F))
    a = xavier_uniform(k2, (H, 2 * F))
    a_src, a_dst = a[:, :F], a[:, F:]
    eyeH = jnp.eye(H, dtype=jnp.float32)
    # block-diagonal projections: att_src = Wh @ A_src  <=>  sum_f Wh[n,h,f]*a_src[h,f]
    A_src = (a_src[:, :, None] * eyeH[:, None, :]).reshape(H * F, H)
    A_dst = (a_dst[:, :, None] * eyeH[:, None, :]).reshape(H * F, H)
    A_cat = jnp.concatenate([A_src, A_dst], axis=1)          # [H*F, 2H]
    return {"W": W, "A_cat": A_cat,
            "bias": jnp.zeros((H * F,), jnp.float32)}


def make_params(key, input_dim, hidden_dim, output_dim, n_heads):
    ks = jax.random.split(key, 8)
    H, F = n_heads, hidden_dim
    return {
        "emb_W": xavier_uniform(ks[0], (1, input_dim)),
        "emb_b": jnp.zeros((input_dim,), jnp.float32),
        "ln_in_g": jnp.ones((input_dim,), jnp.float32),
        "ln_in_b": jnp.zeros((input_dim,), jnp.float32),
        "gat1": make_gat_params(ks[1], input_dim, hidden_dim, n_heads),
        "ln1_g": jnp.ones((hidden_dim,), jnp.float32),
        "ln1_b": jnp.zeros((hidden_dim,), jnp.float32),
        "gat2": make_gat_params(ks[2], hidden_dim, hidden_dim, n_heads),
        "ln2_g": jnp.ones((hidden_dim,), jnp.float32),
        "ln2_b": jnp.zeros((hidden_dim,), jnp.float32),
        "mlp_W1": xavier_uniform(ks[3], (2 * hidden_dim, 2 * hidden_dim)),
        "mlp_b1": jnp.zeros((2 * hidden_dim,), jnp.float32),
        "mlp_W2": xavier_uniform(ks[4], (2 * hidden_dim, hidden_dim)),
        "mlp_b2": jnp.zeros((hidden_dim,), jnp.float32),
        "mlp_W3": xavier_uniform(ks[5], (hidden_dim, output_dim)),
        "mlp_b3": jnp.zeros((output_dim,), jnp.float32),
        # shared constants, built once (review item 10)
        "expander": jnp.repeat(jnp.eye(H, dtype=jnp.float32), F, axis=1),    # [H, H*F]
        "head_mean": jnp.tile(jnp.eye(F, dtype=jnp.float32), (H, 1)) / H,    # [H*F, F]
    }


# --------------------------------- main ------------------------------------ #

if __name__ == "__main__":
    input_dim, hidden_dim, output_dim, n_heads = 16, 32, 4, 4
    num_graphs, nodes_per_graph = 2, 8
    num_nodes = num_graphs * nodes_per_graph

    # deterministic small graph: bidirectional ring per graph
    edges = []
    for g in range(num_graphs):
        base = g * nodes_per_graph
        for i in range(nodes_per_graph):
            j = (i + 1) % nodes_per_graph
            edges.append((base + i, base + j))
            edges.append((base + j, base + i))
    edge_index = jnp.array(edges, dtype=jnp.int32).T          # [2, E]
    batch = jnp.repeat(jnp.arange(num_graphs, dtype=jnp.int32), nodes_per_graph)

    key = jax.random.PRNGKey(0)
    params = make_params(key, input_dim, hidden_dim, output_dim, n_heads)

    out = gat_edge_model_forward(params, edge_index, batch, num_nodes,
                                 num_graphs, n_heads, hidden_dim,
                                 _edge_tile_cap())
    jax.block_until_ready(out)
    assert out.shape == (num_graphs, output_dim)
    assert bool(jnp.all(jnp.isfinite(out)))
    print("KERNEL_OK")
</pallas_src>

<mosaic_0001>
module attributes {stable_mosaic.version = 11 : i64} {
  func.func private @main(%arg0: i32) attributes {dimension_semantics = [#tpu.dimension_semantics<core_parallel>], iteration_bounds = array<i64: 2>, tpu.core_type = #tpu.core_type<sc_scalar_subcore>, window_params = []} {
    return
  }
}

module attributes {stable_mosaic.version = 11 : i64} {
  func.func private @main(%arg0: i32) attributes {dimension_semantics = [#tpu.dimension_semantics<core_parallel>], iteration_bounds = array<i64: 2>, tpu.core_type = #tpu.core_type<sc_scalar_subcore>, window_params = []} {
    return
  }
}

module attributes {stable_mosaic.version = 11 : i64} {
  func.func @_embed_project_kernel(%arg0: i32, %arg1: memref<16x1xf32, #tpu.memory_space<vmem>>, %arg2: memref<1x16xf32, #tpu.memory_space<vmem>>, %arg3: memref<1x16xf32, #tpu.memory_space<vmem>>, %arg4: memref<1x16xf32, #tpu.memory_space<vmem>>, %arg5: memref<1x16xf32, #tpu.memory_space<vmem>>, %arg6: memref<16x128xf32, #tpu.memory_space<vmem>>, %arg7: memref<16x128xbf16, #tpu.memory_space<vmem>>) attributes {dimension_semantics = [#tpu.dimension_semantics<parallel>], iteration_bounds = array<i64: 1>, scalar_prefetch = 0 : i64, scratch_operands = 0 : i64, tpu.core_type = #tpu.core_type<tc>, window_params = [{transform_indices = @transform_0, window_bounds = array<i64: 16, 1>}, {pipeline_mode = #tpu.pipeline_mode<synchronous>, transform_indices = @transform_1, window_bounds = array<i64: 1, 16>}, {pipeline_mode = #tpu.pipeline_mode<synchronous>, transform_indices = @transform_2, window_bounds = array<i64: 1, 16>}, {pipeline_mode = #tpu.pipeline_mode<synchronous>, transform_indices = @transform_3, window_bounds = array<i64: 1, 16>}, {pipeline_mode = #tpu.pipeline_mode<synchronous>, transform_indices = @transform_4, window_bounds = array<i64: 1, 16>}, {pipeline_mode = #tpu.pipeline_mode<synchronous>, transform_indices = @transform_5, window_bounds = array<i64: 16, 128>}, {transform_indices = @transform_6, window_bounds = array<i64: 16, 128>}]} {
    %c0 = arith.constant 0 : index
    %c0_0 = arith.constant 0 : index
    %0 = vector.load %arg1[%c0, %c0_0] : memref<16x1xf32, #tpu.memory_space<vmem>>, vector<16x1xf32>
    %c0_1 = arith.constant 0 : index
    %c0_2 = arith.constant 0 : index
    %1 = vector.load %arg2[%c0_1, %c0_2] : memref<1x16xf32, #tpu.memory_space<vmem>>, vector<1x16xf32>
    %2 = vector.broadcast %0 : vector<16x1xf32> to vector<16x16xf32>
    %3 = vector.broadcast %1 : vector<1x16xf32> to vector<16x16xf32>
    %4 = arith.mulf %2, %3 : vector<16x16xf32>
    %c0_3 = arith.constant 0 : index
    %c0_4 = arith.constant 0 : index
    %5 = vector.load %arg3[%c0_3, %c0_4] : memref<1x16xf32, #tpu.memory_space<vmem>>, vector<1x16xf32>
    %6 = vector.broadcast %5 : vector<1x16xf32> to vector<16x16xf32>
    %7 = arith.addf %4, %6 : vector<16x16xf32>
    %cst = arith.constant dense<0.000000e+00> : vector<16xf32>
    %8 = vector.multi_reduction <add>, %7, %cst [1] : vector<16x16xf32> to vector<16xf32>
    %9 = vector.shape_cast %8 : vector<16xf32> to vector<16x1xf32>
    %cst_5 = arith.constant 1.600000e+01 : f32
    %10 = vector.broadcast %cst_5 : f32 to vector<16x1xf32>
    %11 = arith.divf %9, %10 : vector<16x1xf32>
    %12 = vector.broadcast %11 : vector<16x1xf32> to vector<16x16xf32>
    %13 = arith.subf %7, %12 : vector<16x16xf32>
    %14 = arith.mulf %13, %13 : vector<16x16xf32>
    %cst_6 = arith.constant dense<0.000000e+00> : vector<16xf32>
    %15 = vector.multi_reduction <add>, %14, %cst_6 [1] : vector<16x16xf32> to vector<16xf32>
    %16 = vector.shape_cast %15 : vector<16xf32> to vector<16x1xf32>
    %cst_7 = arith.constant 1.600000e+01 : f32
    %17 = vector.broadcast %cst_7 : f32 to vector<16x1xf32>
    %18 = arith.divf %16, %17 : vector<16x1xf32>
    %19 = vector.broadcast %11 : vector<16x1xf32> to vector<16x16xf32>
    %20 = arith.subf %7, %19 : vector<16x16xf32>
    %cst_8 = arith.constant 9.99999974E-6 : f32
    %21 = vector.broadcast %cst_8 : f32 to vector<16x1xf32>
    %22 = arith.addf %18, %21 : vector<16x1xf32>
    %23 = math.rsqrt %22 : vector<16x1xf32>
    %24 = vector.broadcast %23 : vector<16x1xf32> to vector<16x16xf32>
    %25 = arith.mulf %20, %24 : vector<16x16xf32>
    %c0_9 = arith.constant 0 : index
    %c0_10 = arith.constant 0 : index
    %26 = vector.load %arg4[%c0_9, %c0_10] : memref<1x16xf32, #tpu.memory_space<vmem>>, vector<1x16xf32>
    %27 = vector.broadcast %26 : vector<1x16xf32> to vector<16x16xf32>
    %28 = arith.mulf %25, %27 : vector<16x16xf32>
    %c0_11 = arith.constant 0 : index
    %c0_12 = arith.constant 0 : index
    %29 = vector.load %arg5[%c0_11, %c0_12] : memref<1x16xf32, #tpu.memory_space<vmem>>, vector<1x16xf32>
    %30 = vector.broadcast %29 : vector<1x16xf32> to vector<16x16xf32>
    %31 = arith.addf %28, %30 : vector<16x16xf32>
    %c0_13 = arith.constant 0 : index
    %c0_14 = arith.constant 0 : index
    %32 = vector.load %arg6[%c0_13, %c0_14] : memref<16x128xf32, #tpu.memory_space<vmem>>, vector<16x128xf32>
    %cst_15 = arith.constant dense<0.000000e+00> : vector<16x128xf32>
    %33 = tpu.matmul %31, %32, %cst_15 {dimension_numbers = #tpu.dot_dimension_numbers<[1], [0], [0], [1], [0, 0, 1, 1], [], []>} : vector<16x16xf32>, vector<16x128xf32>, vector<16x128xf32> -> vector<16x128xf32>
    %34 = arith.truncf %33 : vector<16x128xf32> to vector<16x128xbf16>
    %c0_16 = arith.constant 0 : index
    %c0_17 = arith.constant 0 : index
    %35 = vector.load %arg7[%c0_16, %c0_17] : memref<16x128xbf16, #tpu.memory_space<vmem>>, vector<16x128xbf16>
    tpu.vector_store %arg7[%c0_16, %c0_17], %34 {strides = array<i32>} : memref<16x128xbf16, #tpu.memory_space<vmem>>, vector<16x128xbf16>,
    return
  }
  func.func @transform_0(%arg0: i32) -> (i32, i32) {
    %c0_i32 = arith.constant 0 : i32
    %c0_i32_0 = arith.constant 0 : i32
    return %arg0, %c0_i32 : i32, i32
  }
  func.func @transform_1(%arg0: i32) -> (i32, i32) {
    %c0_i32 = arith.constant 0 : i32
    %c0_i32_0 = arith.constant 0 : i32
    %c0_i32_1 = arith.constant 0 : i32
    return %c0_i32, %c0_i32_0 : i32, i32
  }
  func.func @transform_2(%arg0: i32) -> (i32, i32) {
    %c0_i32 = arith.constant 0 : i32
    %c0_i32_0 = arith.constant 0 : i32
    %c0_i32_1 = arith.constant 0 : i32
    return %c0_i32, %c0_i32_0 : i32, i32
  }
  func.func @transform_3(%arg0: i32) -> (i32, i32) {
    %c0_i32 = arith.constant 0 : i32
    %c0_i32_0 = arith.constant 0 : i32
    %c0_i32_1 = arith.constant 0 : i32
    return %c0_i32, %c0_i32_0 : i32, i32
  }
  func.func @transform_4(%arg0: i32) -> (i32, i32) {
    %c0_i32 = arith.constant 0 : i32
    %c0_i32_0 = arith.constant 0 : i32
    %c0_i32_1 = arith.constant 0 : i32
    return %c0_i32, %c0_i32_0 : i32, i32
  }
  func.func @transform_5(%arg0: i32) -> (i32, i32) {
    %c0_i32 = arith.constant 0 : i32
    %c0_i32_0 = arith.constant 0 : i32
    %c0_i32_1 = arith.constant 0 : i32
    return %c0_i32, %c0_i32_0 : i32, i32
  }
  func.func @transform_6(%arg0: i32) -> (i32, i32) {
    %c0_i32 = arith.constant 0 : i32
    %c0_i32_0 = arith.constant 0 : i32
    return %arg0, %c0_i32 : i32, i32
  }
}

module attributes {stable_mosaic.version = 11 : i64} {
  func.func @_project_kernel(%arg0: i32, %arg1: memref<16x32xf32, #tpu.memory_space<vmem>>, %arg2: memref<32x128xf32, #tpu.memory_space<vmem>>, %arg3: memref<16x128xbf16, #tpu.memory_space<vmem>>) attributes {dimension_semantics = [#tpu.dimension_semantics<parallel>], iteration_bounds = array<i64: 1>, scalar_prefetch = 0 : i64, scratch_operands = 0 : i64, tpu.core_type = #tpu.core_type<tc>, window_params = [{transform_indices = @transform_0, window_bounds = array<i64: 16, 32>}, {pipeline_mode = #tpu.pipeline_mode<synchronous>, transform_indices = @transform_1, window_bounds = array<i64: 32, 128>}, {transform_indices = @transform_2, window_bounds = array<i64: 16, 128>}]} {
    %c0 = arith.constant 0 : index
    %c0_0 = arith.constant 0 : index
    %0 = vector.load %arg1[%c0, %c0_0] : memref<16x32xf32, #tpu.memory_space<vmem>>, vector<16x32xf32>
    %c0_1 = arith.constant 0 : index
    %c0_2 = arith.constant 0 : index
    %1 = vector.load %arg2[%c0_1, %c0_2] : memref<32x128xf32, #tpu.memory_space<vmem>>, vector<32x128xf32>
    %cst = arith.constant dense<0.000000e+00> : vector<16x128xf32>
    %2 = tpu.matmul %0, %1, %cst {dimension_numbers = #tpu.dot_dimension_numbers<[1], [0], [0], [1], [0, 0, 1, 1], [], []>} : vector<16x32xf32>, vector<32x128xf32>, vector<16x128xf32> -> vector<16x128xf32>
    %3 = arith.truncf %2 : vector<16x128xf32> to vector<16x128xbf16>
    %c0_3 = arith.constant 0 : index
    %c0_4 = arith.constant 0 : index
    %4 = vector.load %arg3[%c0_3, %c0_4] : memref<16x128xbf16, #tpu.memory_space<vmem>>, vector<16x128xbf16>
    tpu.vector_store %arg3[%c0_3, %c0_4], %3 {strides = array<i32>} : memref<16x128xbf16, #tpu.memory_space<vmem>>, vector<16x128xbf16>,
    return
  }
  func.func @transform_0(%arg0: i32) -> (i32, i32) {
    %c0_i32 = arith.constant 0 : i32
    %c0_i32_0 = arith.constant 0 : i32
    return %arg0, %c0_i32 : i32, i32
  }
  func.func @transform_1(%arg0: i32) -> (i32, i32) {
    %c0_i32 = arith.constant 0 : i32
    %c0_i32_0 = arith.constant 0 : i32
    %c0_i32_1 = arith.constant 0 : i32
    return %c0_i32, %c0_i32_0 : i32, i32
  }
  func.func @transform_2(%arg0: i32) -> (i32, i32) {
    %c0_i32 = arith.constant 0 : i32
    %c0_i32_0 = arith.constant 0 : i32
    return %arg0, %c0_i32 : i32, i32
  }
}

module attributes {stable_mosaic.version = 11 : i64} {
  func.func @_gat_aggregate_kernel(%arg0: i32, %arg1: i32, %arg2: memref<1xi32, #tpu.memory_space<smem>>, %arg3: memref<1xi32, #tpu.memory_space<smem>>, %arg4: memref<1x128xi32, #tpu.memory_space<vmem>>, %arg5: memref<128x4xf32, #tpu.memory_space<vmem>>, %arg6: memref<128x128xbf16, #tpu.memory_space<vmem>>, %arg7: memref<4x128xf32, #tpu.memory_space<vmem>>, %arg8: memref<128x32xf32, #tpu.memory_space<vmem>>, %arg9: memref<1x128xf32, #tpu.memory_space<vmem>>, %arg10: memref<1x32xf32, #tpu.memory_space<vmem>>, %arg11: memref<1x32xf32, #tpu.memory_space<vmem>>, %arg12: memref<16x32xf32, #tpu.memory_space<vmem>>, %arg13: memref<16x128xf32, #tpu.memory_space<vmem>>) attributes {dimension_semantics = [#tpu.dimension_semantics<parallel>, #tpu.dimension_semantics<arbitrary>], iteration_bounds = array<i64: 1, 1>, scalar_prefetch = 2 : i64, scratch_operands = 1 : i64, tpu.core_type = #tpu.core_type<tc>, window_params = [{transform_indices = @transform_0, window_bounds = array<i64: 1, 128>}, {transform_indices = @transform_1, window_bounds = array<i64: 128, 4>}, {transform_indices = @transform_2, window_bounds = array<i64: 128, 128>}, {pipeline_mode = #tpu.pipeline_mode<synchronous>, transform_indices = @transform_3, window_bounds = array<i64: 4, 128>}, {pipeline_mode = #tpu.pipeline_mode<synchronous>, transform_indices = @transform_4, window_bounds = array<i64: 128, 32>}, {pipeline_mode = #tpu.pipeline_mode<synchronous>, transform_indices = @transform_5, window_bounds = array<i64: 1, 128>}, {pipeline_mode = #tpu.pipeline_mode<synchronous>, transform_indices = @transform_6, window_bounds = array<i64: 1, 32>}, {pipeline_mode = #tpu.pipeline_mode<synchronous>, transform_indices = @transform_7, window_bounds = array<i64: 1, 32>}, {transform_indices = @transform_8, window_bounds = array<i64: 16, 32>}]} {
    %c0_i32 = arith.constant 0 : i32
    %0 = arith.cmpi eq, %arg1, %c0_i32 : i32
    %1 = arith.extui %0 : i1 to i32
    %c0_i32_0 = arith.constant 0 : i32
    %2 = arith.cmpi ne, %1, %c0_i32_0 : i32
    scf.if %2 {
      %cst = arith.constant 0.000000e+00 : f32
      %11 = vector.broadcast %cst : f32 to vector<16x128xf32>
      %c0 = arith.constant 0 : index
      %c0_4 = arith.constant 0 : index
      %12 = vector.load %arg13[%c0, %c0_4] : memref<16x128xf32, #tpu.memory_space<vmem>>, vector<16x128xf32>
      tpu.vector_store %arg13[%c0, %c0_4], %11 {strides = array<i32>} : memref<16x128xf32, #tpu.memory_space<vmem>>, vector<16x128xf32>,
    } else {
    }
    %3 = arith.index_cast %arg0 : i32 to index
    %4 = memref.load %arg3[%3] : memref<1xi32, #tpu.memory_space<smem>>
    %5 = arith.cmpi slt, %arg1, %4 : i32
    %6 = arith.extui %5 : i1 to i32
    %c0_i32_1 = arith.constant 0 : i32
    %7 = arith.cmpi ne, %6, %c0_i32_1 : i32
    scf.if %7 {
      %c0 = arith.constant 0 : index
      %c0_4 = arith.constant 0 : index
      %11 = vector.load %arg4[%c0, %c0_4] : memref<1x128xi32, #tpu.memory_space<vmem>>, vector<1x128xi32>
      %c0_5 = arith.constant 0 : index
      %c0_6 = arith.constant 0 : index
      %12 = vector.load %arg5[%c0_5, %c0_6] : memref<128x4xf32, #tpu.memory_space<vmem>>, vector<128x4xf32>
      %c0_7 = arith.constant 0 : index
      %c0_8 = arith.constant 0 : index
      %13 = vector.load %arg7[%c0_7, %c0_8] : memref<4x128xf32, #tpu.memory_space<vmem>>, vector<4x128xf32>
      %cst = arith.constant dense<0.000000e+00> : vector<128x128xf32>
      %14 = tpu.matmul %12, %13, %cst {dimension_numbers = #tpu.dot_dimension_numbers<[1], [0], [0], [1], [0, 0, 1, 1], [], []>} : vector<128x4xf32>, vector<4x128xf32>, vector<128x128xf32> -> vector<128x128xf32>
      %c0_9 = arith.constant 0 : index
      %c0_10 = arith.constant 0 : index
      %15 = vector.load %arg6[%c0_9, %c0_10] : memref<128x128xbf16, #tpu.memory_space<vmem>>, vector<128x128xbf16>
      %16 = arith.extf %15 : vector<128x128xbf16> to vector<128x128xf32>
      %17 = arith.mulf %14, %16 : vector<128x128xf32>
      %18 = arith.truncf %17 : vector<128x128xf32> to vector<128x128xbf16>
      %19 = tpu.iota {dimensions = array<i32: 0>} : vector<16x128xi32>
      %c16_i32 = arith.constant 16 : i32
      %20 = arith.muli %arg0, %c16_i32 : i32
      %21 = vector.broadcast %20 : i32 to vector<16x128xi32>
      %22 = arith.addi %19, %21 : vector<16x128xi32>
      %23 = vector.broadcast %11 : vector<1x128xi32> to vector<16x128xi32>
      %24 = arith.cmpi eq, %22, %23 : vector<16x128xi32>
      %cst_11 = arith.constant 1.000000e+00 : f32
      %cst_12 = arith.constant 0.000000e+00 : f32
      %25 = vector.broadcast %cst_11 : f32 to vector<16x128xf32>
      %26 = vector.broadcast %cst_12 : f32 to vector<16x128xf32>
      %27 = arith.select %24, %25, %26 : vector<16x128xi1>, vector<16x128xf32>
      %28 = arith.truncf %27 : vector<16x128xf32> to vector<16x128xbf16>
      %c0_13 = arith.constant 0 : index
      %c0_14 = arith.constant 0 : index
      %29 = vector.load %arg13[%c0_13, %c0_14] : memref<16x128xf32, #tpu.memory_space<vmem>>, vector<16x128xf32>
      %cst_15 = arith.constant dense<0.000000e+00> : vector<16x128xf32>
      %30 = tpu.matmul %28, %18, %cst_15 {dimension_numbers = #tpu.dot_dimension_numbers<[1], [0], [0], [1], [0, 0, 1, 1], [], []>} : vector<16x128xbf16>, vector<128x128xbf16>, vector<16x128xf32> -> vector<16x128xf32>
      %31 = arith.addf %29, %30 : vector<16x128xf32>
      %c0_16 = arith.constant 0 : index
      %c0_17 = arith.constant 0 : index
      %32 = vector.load %arg13[%c0_16, %c0_17] : memref<16x128xf32, #tpu.memory_space<vmem>>, vector<16x128xf32>
      tpu.vector_store %arg13[%c0_16, %c0_17], %31 {strides = array<i32>} : memref<16x128xf32, #tpu.memory_space<vmem>>, vector<16x128xf32>,
    } else {
    }
    %c0_i32_2 = arith.constant 0 : i32
    %8 = arith.cmpi eq, %arg1, %c0_i32_2 : i32
    %9 = arith.extui %8 : i1 to i32
    %c0_i32_3 = arith.constant 0 : i32
    %10 = arith.cmpi ne, %9, %c0_i32_3 : i32
    scf.if %10 {
      %c0 = arith.constant 0 : index
      %c0_4 = arith.constant 0 : index
      %11 = vector.load %arg13[%c0, %c0_4] : memref<16x128xf32, #tpu.memory_space<vmem>>, vector<16x128xf32>
      %c0_5 = arith.constant 0 : index
      %c0_6 = arith.constant 0 : index
      %12 = vector.load %arg9[%c0_5, %c0_6] : memref<1x128xf32, #tpu.memory_space<vmem>>, vector<1x128xf32>
      %13 = vector.broadcast %12 : vector<1x128xf32> to vector<16x128xf32>
      %14 = arith.addf %11, %13 : vector<16x128xf32>
      %c0_7 = arith.constant 0 : index
      %c0_8 = arith.constant 0 : index
      %15 = vector.load %arg8[%c0_7, %c0_8] : memref<128x32xf32, #tpu.memory_space<vmem>>, vector<128x32xf32>
      %cst = arith.constant dense<0.000000e+00> : vector<16x32xf32>
      %16 = tpu.matmul %14, %15, %cst {dimension_numbers = #tpu.dot_dimension_numbers<[1], [0], [0], [1], [0, 0, 1, 1], [], []>} : vector<16x128xf32>, vector<128x32xf32>, vector<16x32xf32> -> vector<16x32xf32>
      %cst_9 = arith.constant dense<0.000000e+00> : vector<16xf32>
      %17 = vector.multi_reduction <add>, %16, %cst_9 [1] : vector<16x32xf32> to vector<16xf32>
      %18 = vector.shape_cast %17 : vector<16xf32> to vector<16x1xf32>
      %cst_10 = arith.constant 3.200000e+01 : f32
      %19 = vector.broadcast %cst_10 : f32 to vector<16x1xf32>
      %20 = arith.divf %18, %19 : vector<16x1xf32>
      %21 = vector.broadcast %20 : vector<16x1xf32> to vector<16x32xf32>
      %22 = arith.subf %16, %21 : vector<16x32xf32>
      %23 = arith.mulf %22, %22 : vector<16x32xf32>
      %cst_11 = arith.constant dense<0.000000e+00> : vector<16xf32>
      %24 = vector.multi_reduction <add>, %23, %cst_11 [1] : vector<16x32xf32> to vector<16xf32>
      %25 = vector.shape_cast %24 : vector<16xf32> to vector<16x1xf32>
      %cst_12 = arith.constant 3.200000e+01 : f32
      %26 = vector.broadcast %cst_12 : f32 to vector<16x1xf32>
      %27 = arith.divf %25, %26 : vector<16x1xf32>
      %28 = vector.broadcast %20 : vector<16x1xf32> to vector<16x32xf32>
      %29 = arith.subf %16, %28 : vector<16x32xf32>
      %cst_13 = arith.constant 9.99999974E-6 : f32
      %30 = vector.broadcast %cst_13 : f32 to vector<16x1xf32>
      %31 = arith.addf %27, %30 : vector<16x1xf32>
      %32 = math.rsqrt %31 : vector<16x1xf32>
      %33 = vector.broadcast %32 : vector<16x1xf32> to vector<16x32xf32>
      %34 = arith.mulf %29, %33 : vector<16x32xf32>
      %c0_14 = arith.constant 0 : index
      %c0_15 = arith.constant 0 : index
      %35 = vector.load %arg10[%c0_14, %c0_15] : memref<1x32xf32, #tpu.memory_space<vmem>>, vector<1x32xf32>
      %36 = vector.broadcast %35 : vector<1x32xf32> to vector<16x32xf32>
      %37 = arith.mulf %34, %36 : vector<16x32xf32>
      %c0_16 = arith.constant 0 : index
      %c0_17 = arith.constant 0 : index
      %38 = vector.load %arg11[%c0_16, %c0_17] : memref<1x32xf32, #tpu.memory_space<vmem>>, vector<1x32xf32>
      %39 = vector.broadcast %38 : vector<1x32xf32> to vector<16x32xf32>
      %40 = arith.addf %37, %39 : vector<16x32xf32>
      %cst_18 = arith.constant 0.000000e+00 : f32
      %41 = vector.broadcast %cst_18 : f32 to vector<16x32xf32>
      %42 = arith.maximumf %40, %41 : vector<16x32xf32>
      %c0_19 = arith.constant 0 : index
      %c0_20 = arith.constant 0 : index
      %43 = vector.load %arg12[%c0_19, %c0_20] : memref<16x32xf32, #tpu.memory_space<vmem>>, vector<16x32xf32>
      tpu.vector_store %arg12[%c0_19, %c0_20], %42 {strides = array<i32>} : memref<16x32xf32, #tpu.memory_space<vmem>>, vector<16x32xf32>,
    } else {
    }
    return
  }
  func.func @transform_0(%arg0: i32, %arg1: i32, %arg2: memref<1xi32, #tpu.memory_space<smem>>, %arg3: memref<1xi32, #tpu.memory_space<smem>>) -> (i32, i32) {
    %0 = arith.index_cast %arg0 : i32 to index
    %1 = memref.load %arg2[%0] : memref<1xi32, #tpu.memory_space<smem>>
    %2 = arith.index_cast %arg0 : i32 to index
    %3 = memref.load %arg3[%2] : memref<1xi32, #tpu.memory_space<smem>>
    %c1_i32 = arith.constant 1 : i32
    %4 = arith.subi %3, %c1_i32 : i32
    %c0_i32 = arith.constant 0 : i32
    %5 = arith.maxsi %4, %c0_i32 : i32
    %6 = arith.minsi %arg1, %5 : i32
    %7 = arith.addi %1, %6 : i32
    %c0_i32_0 = arith.constant 0 : i32
    %c0_i32_1 = arith.constant 0 : i32
    return %c0_i32_0, %7 : i32, i32
  }
  func.func @transform_1(%arg0: i32, %arg1: i32, %arg2: memref<1xi32, #tpu.memory_space<smem>>, %arg3: memref<1xi32, #tpu.memory_space<smem>>) -> (i32, i32) {
    %0 = arith.index_cast %arg0 : i32 to index
    %1 = memref.load %arg2[%0] : memref<1xi32, #tpu.memory_space<smem>>
    %2 = arith.index_cast %arg0 : i32 to index
    %3 = memref.load %arg3[%2] : memref<1xi32, #tpu.memory_space<smem>>
    %c1_i32 = arith.constant 1 : i32
    %4 = arith.subi %3, %c1_i32 : i32
    %c0_i32 = arith.constant 0 : i32
    %5 = arith.maxsi %4, %c0_i32 : i32
    %6 = arith.minsi %arg1, %5 : i32
    %7 = arith.addi %1, %6 : i32
    %c0_i32_0 = arith.constant 0 : i32
    %c0_i32_1 = arith.constant 0 : i32
    return %7, %c0_i32_0 : i32, i32
  }
  func.func @transform_2(%arg0: i32, %arg1: i32, %arg2: memref<1xi32, #tpu.memory_space<smem>>, %arg3: memref<1xi32, #tpu.memory_space<smem>>) -> (i32, i32) {
    %0 = arith.index_cast %arg0 : i32 to index
    %1 = memref.load %arg2[%0] : memref<1xi32, #tpu.memory_space<smem>>
    %2 = arith.index_cast %arg0 : i32 to index
    %3 = memref.load %arg3[%2] : memref<1xi32, #tpu.memory_space<smem>>
    %c1_i32 = arith.constant 1 : i32
    %4 = arith.subi %3, %c1_i32 : i32
    %c0_i32 = arith.constant 0 : i32
    %5 = arith.maxsi %4, %c0_i32 : i32
    %6 = arith.minsi %arg1, %5 : i32
    %7 = arith.addi %1, %6 : i32
    %c0_i32_0 = arith.constant 0 : i32
    %c0_i32_1 = arith.constant 0 : i32
    return %7, %c0_i32_0 : i32, i32
  }
  func.func @transform_3(%arg0: i32, %arg1: i32, %arg2: memref<1xi32, #tpu.memory_space<smem>>, %arg3: memref<1xi32, #tpu.memory_space<smem>>) -> (i32, i32) {
    %c0_i32 = arith.constant 0 : i32
    %c0_i32_0 = arith.constant 0 : i32
    %c0_i32_1 = arith.constant 0 : i32
    return %c0_i32, %c0_i32_0 : i32, i32
  }
  func.func @transform_4(%arg0: i32, %arg1: i32, %arg2: memref<1xi32, #tpu.memory_space<smem>>, %arg3: memref<1xi32, #tpu.memory_space<smem>>) -> (i32, i32) {
    %c0_i32 = arith.constant 0 : i32
    %c0_i32_0 = arith.constant 0 : i32
    %c0_i32_1 = arith.constant 0 : i32
    return %c0_i32, %c0_i32_0 : i32, i32
  }
  func.func @transform_5(%arg0: i32, %arg1: i32, %arg2: memref<1xi32, #tpu.memory_space<smem>>, %arg3: memref<1xi32, #tpu.memory_space<smem>>) -> (i32, i32) {
    %c0_i32 = arith.constant 0 : i32
    %c0_i32_0 = arith.constant 0 : i32
    %c0_i32_1 = arith.constant 0 : i32
    return %c0_i32, %c0_i32_0 : i32, i32
  }
  func.func @transform_6(%arg0: i32, %arg1: i32, %arg2: memref<1xi32, #tpu.memory_space<smem>>, %arg3: memref<1xi32, #tpu.memory_space<smem>>) -> (i32, i32) {
    %c0_i32 = arith.constant 0 : i32
    %c0_i32_0 = arith.constant 0 : i32
    %c0_i32_1 = arith.constant 0 : i32
    return %c0_i32, %c0_i32_0 : i32, i32
  }
  func.func @transform_7(%arg0: i32, %arg1: i32, %arg2: memref<1xi32, #tpu.memory_space<smem>>, %arg3: memref<1xi32, #tpu.memory_space<smem>>) -> (i32, i32) {
    %c0_i32 = arith.constant 0 : i32
    %c0_i32_0 = arith.constant 0 : i32
    %c0_i32_1 = arith.constant 0 : i32
    return %c0_i32, %c0_i32_0 : i32, i32
  }
  func.func @transform_8(%arg0: i32, %arg1: i32, %arg2: memref<1xi32, #tpu.memory_space<smem>>, %arg3: memref<1xi32, #tpu.memory_space<smem>>) -> (i32, i32) {
    %c0_i32 = arith.constant 0 : i32
    %c0_i32_0 = arith.constant 0 : i32
    return %arg0, %c0_i32 : i32, i32
  }
}

module attributes {stable_mosaic.version = 11 : i64} {
  func.func @_mlp_kernel(%arg0: memref<2x64xf32, #tpu.memory_space<vmem>>, %arg1: memref<64x64xf32, #tpu.memory_space<vmem>>, %arg2: memref<1x64xf32, #tpu.memory_space<vmem>>, %arg3: memref<64x32xf32, #tpu.memory_space<vmem>>, %arg4: memref<1x32xf32, #tpu.memory_space<vmem>>, %arg5: memref<32x4xf32, #tpu.memory_space<vmem>>, %arg6: memref<1x4xf32, #tpu.memory_space<vmem>>, %arg7: memref<2x4xf32, #tpu.memory_space<vmem>>) attributes {dimension_semantics = [], scalar_prefetch = 0 : i64, scratch_operands = 0 : i64, tpu.core_type = #tpu.core_type<tc>} {
    %c0 = arith.constant 0 : index
    %c0_0 = arith.constant 0 : index
    %0 = vector.load %arg0[%c0, %c0_0] : memref<2x64xf32, #tpu.memory_space<vmem>>, vector<2x64xf32>
    %c0_1 = arith.constant 0 : index
    %c0_2 = arith.constant 0 : index
    %1 = vector.load %arg1[%c0_1, %c0_2] : memref<64x64xf32, #tpu.memory_space<vmem>>, vector<64x64xf32>
    %cst = arith.constant dense<0.000000e+00> : vector<2x64xf32>
    %2 = tpu.matmul %0, %1, %cst {dimension_numbers = #tpu.dot_dimension_numbers<[1], [0], [0], [1], [0, 0, 1, 1], [], []>} : vector<2x64xf32>, vector<64x64xf32>, vector<2x64xf32> -> vector<2x64xf32>
    %c0_3 = arith.constant 0 : index
    %c0_4 = arith.constant 0 : index
    %3 = vector.load %arg2[%c0_3, %c0_4] : memref<1x64xf32, #tpu.memory_space<vmem>>, vector<1x64xf32>
    %4 = vector.broadcast %3 : vector<1x64xf32> to vector<2x64xf32>
    %5 = arith.addf %2, %4 : vector<2x64xf32>
    %cst_5 = arith.constant 0.000000e+00 : f32
    %6 = vector.broadcast %cst_5 : f32 to vector<2x64xf32>
    %7 = arith.maximumf %5, %6 : vector<2x64xf32>
    %c0_6 = arith.constant 0 : index
    %c0_7 = arith.constant 0 : index
    %8 = vector.load %arg3[%c0_6, %c0_7] : memref<64x32xf32, #tpu.memory_space<vmem>>, vector<64x32xf32>
    %cst_8 = arith.constant dense<0.000000e+00> : vector<2x32xf32>
    %9 = tpu.matmul %7, %8, %cst_8 {dimension_numbers = #tpu.dot_dimension_numbers<[1], [0], [0], [1], [0, 0, 1, 1], [], []>} : vector<2x64xf32>, vector<64x32xf32>, vector<2x32xf32> -> vector<2x32xf32>
    %c0_9 = arith.constant 0 : index
    %c0_10 = arith.constant 0 : index
    %10 = vector.load %arg4[%c0_9, %c0_10] : memref<1x32xf32, #tpu.memory_space<vmem>>, vector<1x32xf32>
    %11 = vector.broadcast %10 : vector<1x32xf32> to vector<2x32xf32>
    %12 = arith.addf %9, %11 : vector<2x32xf32>
    %cst_11 = arith.constant 0.000000e+00 : f32
    %13 = vector.broadcast %cst_11 : f32 to vector<2x32xf32>
    %14 = arith.maximumf %12, %13 : vector<2x32xf32>
    %c0_12 = arith.constant 0 : index
    %c0_13 = arith.constant 0 : index
    %15 = vector.load %arg5[%c0_12, %c0_13] : memref<32x4xf32, #tpu.memory_space<vmem>>, vector<32x4xf32>
    %cst_14 = arith.constant dense<0.000000e+00> : vector<2x4xf32>
    %16 = tpu.matmul %14, %15, %cst_14 {dimension_numbers = #tpu.dot_dimension_numbers<[1], [0], [0], [1], [0, 0, 1, 1], [], []>} : vector<2x32xf32>, vector<32x4xf32>, vector<2x4xf32> -> vector<2x4xf32>
    %c0_15 = arith.constant 0 : index
    %c0_16 = arith.constant 0 : index
    %17 = vector.load %arg6[%c0_15, %c0_16] : memref<1x4xf32, #tpu.memory_space<vmem>>, vector<1x4xf32>
    %18 = vector.broadcast %17 : vector<1x4xf32> to vector<2x4xf32>
    %19 = arith.addf %16, %18 : vector<2x4xf32>
    %c0_17 = arith.constant 0 : index
    %c0_18 = arith.constant 0 : index
    %20 = vector.load %arg7[%c0_17, %c0_18] : memref<2x4xf32, #tpu.memory_space<vmem>>, vector<2x4xf32>
    tpu.vector_store %arg7[%c0_17, %c0_18], %19 {strides = array<i32>} : memref<2x4xf32, #tpu.memory_space<vmem>>, vector<2x4xf32>,
    return
  }
}

</mosaic_0001>

<llo_original>
// kernel: custom-call
$region0: #{custom-call}
  %s0 = inlined_call_operand.vmem [shape: u32[2], index: 0, kind: output, shape index: {}]

// kernel: gat_edge_model_forward.7
$region0: #{gat_edge_model_forward.7}
  #allocation0 [shape = 'u32[]', space=smem, size = 0x4, offset = 0x4, fixed_abs, tag = 'smem constant byte address 0x4 - core index']
  #allocation1 [shape = 'u32[144,128]{1,0:T(1,128)}', space=vmem, size = 0x12000, scoped, tag = 'internal scratch']
  %s0 = inlined_call_operand.vmem [shape: f32[16,32], index: 0, kind: input, shape index: {}]
  %s1 = inlined_call_operand.vmem [shape: f32[32,128], index: 1, kind: input, shape index: {}]
  %s2 = inlined_call_operand.vmem [shape: bf16[16,128], index: 2, kind: output, shape index: {}]
  %s3 = sld [smem:[#allocation0]]
  $region18: #{gat_edge_model_forward.7} parent=0
    _
  %s5 = ssub.s32 1, %s3
  %s6 = scalar_select 0, %s5, %s3
  // Predicated region
  $region2: #{gat_edge_model_forward.7} parent=0 // pred_check
    _
  $region3: #{gat_edge_model_forward.7} parent=0 // pred_check_branch
    %8 = sbr.rel (0) target = $region5
  $region4: #{gat_edge_model_forward.7} parent=0 // pred_region
    _
  $region5: #{gat_edge_model_forward.7} parent=0 // pred_fallthru
    _
  // Predicated region
  $region6: #{gat_edge_model_forward.7} parent=0 // pred_check
    _
  $region7: #{gat_edge_model_forward.7} parent=0 // pred_check_branch
    %10 = sbr.rel (0) target = $region9
  $region8: #{gat_edge_model_forward.7} parent=0 // pred_region
    _
  $region9: #{gat_edge_model_forward.7} parent=0 // pred_fallthru
    _
  %v11 = vld [vmem:[%s0] sm:$0xff]
  %v12 = vld [vmem:[%s0 + $0x8] sm:$0xff]
  %v13 = vld [vmem:[%s1] sm:$0xff]
  %v14 = vld [vmem:[%s1 + $0x8] sm:$0xff]
  %v15 = vld [vmem:[%s1 + $0x10] sm:$0xff]
  %v16 = vld [vmem:[%s1 + $0x18] sm:$0xff]
  %vm17 = vcmask 261120
  %v19 = vsel %vm17, %v11, 0
  %v22 = vsel %vm17, %v12, 0
  %24 = vmatprep.subr.mxu0 0.0
  %25 = vmatpush1.msra.mxu0 %v13
  %26 = vmatprep.subr.mxu0 0.0
  %27 = vmatpush1.msra.mxu0 %v14
  %28 = vmatprep.subr.mxu0 0.0
  %29 = vmatpush1.msra.mxu0 %v15
  %30 = vmatprep.subr.mxu0 0.0
  %31 = vmatpush1.msra.mxu0 %v16
  %32 = vmatprep.subr.mxu0 0.0
  %33 = vmatpush1.msra.mxu0 0.0
  %34 = vmatprep.subr.mxu0 0.0
  %35 = vmatpush1.msra.mxu0 0.0
  %36 = vmatprep.subr.mxu0 0.0
  %37 = vmatpush1.msra.mxu0 0.0
  %38 = vmatprep.subr.mxu0 0.0
  %39 = vmatpush1.msra.mxu0 0.0
  %40 = vmatprep.subr.mxu0 0.0
  %41 = vmatpush1.msra.mxu0 0.0
  %42 = vmatprep.subr.mxu0 0.0
  %43 = vmatpush1.msra.mxu0 0.0
  %44 = vmatprep.subr.mxu0 0.0
  %45 = vmatpush1.msra.mxu0 0.0
  %46 = vmatprep.subr.mxu0 0.0
  %47 = vmatpush1.msra.mxu0 0.0
  %48 = vmatprep.subr.mxu0 0.0
  %49 = vmatpush1.msra.mxu0 0.0
  %50 = vmatprep.subr.mxu0 0.0
  %51 = vmatpush1.msra.mxu0 0.0
  %52 = vmatprep.subr.mxu0 0.0
  %53 = vmatpush1.msra.mxu0 0.0
  %54 = vmatprep.subr.mxu0 0.0
  %55 = vmatpush1.msra.mxu0 0.0
  %56 = vmatprep.subr.mxu0 0.0
  %57 = vmatpush1.msra.mxu0 0.0
  %58 = vmatprep.subr.mxu0 0.0
  %59 = vmatpush1.msra.mxu0 0.0
  %60 = vmatprep.subr.mxu0 0.0
  %61 = vmatpush1.msra.mxu0 0.0
  %62 = vmatprep.subr.mxu0 0.0
  %63 = vmatpush1.msra.mxu0 0.0
  %64 = vmatprep.subr.mxu0 0.0
  %65 = vmatpush1.msra.mxu0 0.0
  %66 = vmatprep.subr.mxu0 0.0
  %67 = vmatpush1.msra.mxu0 0.0
  %68 = vmatprep.subr.mxu0 0.0
  %69 = vmatpush1.msra.mxu0 0.0
  %70 = vmatprep.subr.mxu0 0.0
  %71 = vmatpush1.msra.mxu0 0.0
  %72 = vmatprep.subr.mxu0 0.0
  %73 = vmatpush1.msra.mxu0 0.0
  %74 = vmatprep.subr.mxu0 0.0
  %75 = vmatpush1.msra.mxu0 0.0
  %76 = vmatprep.subr.mxu0 0.0
  %77 = vmatpush1.msra.mxu0 0.0
  %78 = vmatprep.subr.mxu0 0.0
  %79 = vmatpush1.msra.mxu0 0.0
  %80 = vmatprep.subr.mxu0 0.0
  %81 = vmatpush1.msra.mxu0 0.0
  %82 = vmatprep.subr.mxu0 0.0
  %83 = vmatpush1.msra.mxu0 0.0
  %84 = vmatprep.subr.mxu0 0.0
  %85 = vmatpush1.msra.mxu0 0.0
  %86 = vmatprep.subr.mxu0 0.0
  %87 = vmatpush1.msra.mxu0 0.0
  %88 = vmatprep.mubr.f32.mxu0 0.0
  %89 = vmatmul.mubr.f32.gmra.mrb[0].mxu0 %v19
  %v90 = vpop.f32.mrb[0].mxu0
  %v91 = vadd.f32 0.0, %v90
  %v92 = vpop.f32.mrb[0].mxu0
  %93 = vmatprep.mubr.f32.mxu0 0.0
  %94 = vmatmul.mubr.f32.gmra.mrb[0].mxu0 %v22
  %v95 = vpop.f32.mrb[0].mxu0
  %v96 = vadd.f32 0.0, %v95
  %v97 = vpop.f32.mrb[0].mxu0
  %98 = vdwg.mxu0
  %v99 = vpack.c.bf16 %v96, %v91
  %100 = vst [vmem:[%s2] sm:$0xff] %v99
  // Predicated region
  $region10: #{gat_edge_model_forward.7} parent=0 // pred_check
    _
  $region11: #{gat_edge_model_forward.7} parent=0 // pred_check_branch
    %102 = sbr.rel (0) target = $region13
  $region12: #{gat_edge_model_forward.7} parent=0 // pred_region
    _
  $region13: #{gat_edge_model_forward.7} parent=0 // pred_fallthru
    _
  // Predicated region
  $region14: #{gat_edge_model_forward.7} parent=0 // pred_check
    _
  $region15: #{gat_edge_model_forward.7} parent=0 // pred_check_branch
    %104 = sbr.rel (0) target = $region17
  $region16: #{gat_edge_model_forward.7} parent=0 // pred_region
    _
  $region17: #{gat_edge_model_forward.7} parent=0 // pred_fallthru
    _

// kernel: gat_edge_model_forward.5
$region0: #{gat_edge_model_forward.5}
  #allocation0 [shape = 'u32[]', space=smem, size = 0x4, offset = 0x4, fixed_abs, tag = 'smem constant byte address 0x4 - core index']
  #allocation1 [shape = 'u32[144,128]{1,0:T(1,128)}', space=vmem, size = 0x12000, scoped, tag = 'internal scratch']
  %s0 = inlined_call_operand.vmem [shape: f32[16,1], index: 0, kind: input, shape index: {}]
  %s1 = inlined_call_operand.vmem [shape: f32[1,16], index: 1, kind: input, shape index: {}]
  %s2 = inlined_call_operand.vmem [shape: f32[1,16], index: 2, kind: input, shape index: {}]
  %s3 = inlined_call_operand.vmem [shape: f32[1,16], index: 3, kind: input, shape index: {}]
  %s4 = inlined_call_operand.vmem [shape: f32[1,16], index: 4, kind: input, shape index: {}]
  %s5 = inlined_call_operand.vmem [shape: f32[16,128], index: 5, kind: input, shape index: {}]
  %s6 = inlined_call_operand.vmem [shape: bf16[16,128], index: 6, kind: output, shape index: {}]
  %s7 = sld [smem:[#allocation0]]
  $region34: #{gat_edge_model_forward.5} parent=0
    _
  %s9 = ssub.s32 1, %s7
  %s10 = scalar_select 0, %s9, %s7
  // Predicated region
  $region2: #{gat_edge_model_forward.5} parent=0 // pred_check
    _
  $region3: #{gat_edge_model_forward.5} parent=0 // pred_check_branch
    %12 = sbr.rel (0) target = $region5
  $region4: #{gat_edge_model_forward.5} parent=0 // pred_region
    _
  $region5: #{gat_edge_model_forward.5} parent=0 // pred_fallthru
    _
  // Predicated region
  $region6: #{gat_edge_model_forward.5} parent=0 // pred_check
    _
  $region7: #{gat_edge_model_forward.5} parent=0 // pred_check_branch
    %14 = sbr.rel (0) target = $region9
  $region8: #{gat_edge_model_forward.5} parent=0 // pred_region
    _
  $region9: #{gat_edge_model_forward.5} parent=0 // pred_fallthru
    _
  // Predicated region
  $region10: #{gat_edge_model_forward.5} parent=0 // pred_check
    _
  $region11: #{gat_edge_model_forward.5} parent=0 // pred_check_branch
    %16 = sbr.rel (0) target = $region13
  $region12: #{gat_edge_model_forward.5} parent=0 // pred_region
    _
  $region13: #{gat_edge_model_forward.5} parent=0 // pred_fallthru
    _
  // Predicated region
  $region14: #{gat_edge_model_forward.5} parent=0 // pred_check
    _
  $region15: #{gat_edge_model_forward.5} parent=0 // pred_check_branch
    %18 = sbr.rel (0) target = $region17
  $region16: #{gat_edge_model_forward.5} parent=0 // pred_region
    _
  $region17: #{gat_edge_model_forward.5} parent=0 // pred_fallthru
    _
  // Predicated region
  $region18: #{gat_edge_model_forward.5} parent=0 // pred_check
    _
  $region19: #{gat_edge_model_forward.5} parent=0 // pred_check_branch
    %20 = sbr.rel (0) target = $region21
  $region20: #{gat_edge_model_forward.5} parent=0 // pred_region
    _
  $region21: #{gat_edge_model_forward.5} parent=0 // pred_fallthru
    _
  // Predicated region
  $region22: #{gat_edge_model_forward.5} parent=0 // pred_check
    _
  $region23: #{gat_edge_model_forward.5} parent=0 // pred_check_branch
    %22 = sbr.rel (0) target = $region25
  $region24: #{gat_edge_model_forward.5} parent=0 // pred_region
    _
  $region25: #{gat_edge_model_forward.5} parent=0 // pred_fallthru
    _
  %v23 = vld [vmem:[%s0] sm:$0xff]
  %v24 = vld [vmem:[%s0 + $0x8] sm:$0xff]
  %v25 = vld [vmem:[%s1] sm:$0x1]
  %27 = vset.pattern.permute.xlu0 0
  %28 = vperm.xlu0 %27, %v23
  %v29 = vpop.permute.xlu0 %28
  %32 = vset.pattern.permute.xlu0 0
  %33 = vperm.xlu0 %32, %v24
  %v34 = vpop.permute.xlu0 %33
  %v37 = vlaneseq
  %v38 = vshrl.u32 %v37, 7
  %v39 = vsub.s32 0, %v38
  %v40 = vrot.slane %v25, %v39
  %v42 = vmul.f32 %v29, %v40
  %v43 = vmul.f32 %v34, %v40
  %v44 = vld [vmem:[%s2] sm:$0x1]
  %v46 = vlaneseq
  %v47 = vshrl.u32 %v46, 7
  %v48 = vsub.s32 0, %v47
  %v49 = vrot.slane %v44, %v48
  %v51 = vadd.f32 %v42, %v49
  %v52 = vadd.f32 %v43, %v49
  %vm53 = vcmask 130048
  %v54 = vsel %vm53, %v51, 0.0
  %55 = vadd.xlane.f32.xlu0 %v54
  %v56 = vpop.xlane.xlu0 %55
  %v57 = vsel %vm53, %v52, 0.0
  %58 = vadd.xlane.f32.xlu0 %v57
  %v59 = vpop.xlane.xlu0 %58
  %v60 = vrcp.pop 16.0
  %v61 = vmul.f32 %v56, %v60
  %v62 = vmul.f32 %v59, %v60
  %v63 = vsub.f32 %v51, %v61
  %v64 = vsub.f32 %v52, %v62
  %v65 = vmul.f32 %v63, %v63
  %v66 = vmul.f32 %v64, %v64
  %v67 = vsel %vm53, %v65, 0.0
  %68 = vadd.xlane.f32.xlu0 %v67
  %v69 = vpop.xlane.xlu0 %68
  %v70 = vsel %vm53, %v66, 0.0
  %71 = vadd.xlane.f32.xlu0 %v70
  %v72 = vpop.xlane.xlu0 %71
  %v73 = vmul.f32 %v69, %v60
  %v74 = vmul.f32 %v72, %v60
  %v75 = vadd.f32 %v73, 1e-05
  %v76 = vadd.f32 %v74, 1e-05
  %v77 = vrsqrt.pop %v75
  %v78 = vrsqrt.pop %v76
  %v79 = vmul.f32 %v63, %v77
  %v80 = vmul.f32 %v64, %v78
  %v81 = vld [vmem:[%s3] sm:$0x1]
  %v83 = vlaneseq
  %v84 = vshrl.u32 %v83, 7
  %v85 = vsub.s32 0, %v84
  %v86 = vrot.slane %v81, %v85
  %v88 = vmul.f32 %v79, %v86
  %v89 = vmul.f32 %v80, %v86
  %v90 = vld [vmem:[%s4] sm:$0x1]
  %v92 = vlaneseq
  %v93 = vshrl.u32 %v92, 7
  %v94 = vsub.s32 0, %v93
  %v95 = vrot.slane %v90, %v94
  %v97 = vadd.f32 %v88, %v95
  %v98 = vadd.f32 %v89, %v95
  %v99 = vld [vmem:[%s5] sm:$0xff]
  %v100 = vld [vmem:[%s5 + $0x8] sm:$0xff]
  %v102 = vsel %vm53, %v97, 0
  %v105 = vsel %vm53, %v98, 0
  %107 = vmatprep.subr.mxu0 0.0
  %108 = vmatpush1.msra.mxu0 %v99
  %109 = vmatprep.subr.mxu0 0.0
  %110 = vmatpush1.msra.mxu0 %v100
  %111 = vmatprep.subr.mxu0 0.0
  %112 = vmatpush1.msra.mxu0 0.0
  %113 = vmatprep.subr.mxu0 0.0
  %114 = vmatpush1.msra.mxu0 0.0
  %115 = vmatprep.subr.mxu0 0.0
  %116 = vmatpush1.msra.mxu0 0.0
  %117 = vmatprep.subr.mxu0 0.0
  %118 = vmatpush1.msra.mxu0 0.0
  %119 = vmatprep.subr.mxu0 0.0
  %120 = vmatpush1.msra.mxu0 0.0
  %121 = vmatprep.subr.mxu0 0.0
  %122 = vmatpush1.msra.mxu0 0.0
  %123 = vmatprep.subr.mxu0 0.0
  %124 = vmatpush1.msra.mxu0 0.0
  %125 = vmatprep.subr.mxu0 0.0
  %126 = vmatpush1.msra.mxu0 0.0
  %127 = vmatprep.subr.mxu0 0.0
  %128 = vmatpush1.msra.mxu0 0.0
  %129 = vmatprep.subr.mxu0 0.0
  %130 = vmatpush1.msra.mxu0 0.0
  %131 = vmatprep.subr.mxu0 0.0
  %132 = vmatpush1.msra.mxu0 0.0
  %133 = vmatprep.subr.mxu0 0.0
  %134 = vmatpush1.msra.mxu0 0.0
  %135 = vmatprep.subr.mxu0 0.0
  %136 = vmatpush1.msra.mxu0 0.0
  %137 = vmatprep.subr.mxu0 0.0
  %138 = vmatpush1.msra.mxu0 0.0
  %139 = vmatprep.subr.mxu0 0.0
  %140 = vmatpush1.msra.mxu0 0.0
  %141 = vmatprep.subr.mxu0 0.0
  %142 = vmatpush1.msra.mxu0 0.0
  %143 = vmatprep.subr.mxu0 0.0
  %144 = vmatpush1.msra.mxu0 0.0
  %145 = vmatprep.subr.mxu0 0.0
  %146 = vmatpush1.msra.mxu0 0.0
  %147 = vmatprep.subr.mxu0 0.0
  %148 = vmatpush1.msra.mxu0 0.0
  %149 = vmatprep.subr.mxu0 0.0
  %150 = vmatpush1.msra.mxu0 0.0
  %151 = vmatprep.subr.mxu0 0.0
  %152 = vmatpush1.msra.mxu0 0.0
  %153 = vmatprep.subr.mxu0 0.0
  %154 = vmatpush1.msra.mxu0 0.0
  %155 = vmatprep.subr.mxu0 0.0
  %156 = vmatpush1.msra.mxu0 0.0
  %157 = vmatprep.subr.mxu0 0.0
  %158 = vmatpush1.msra.mxu0 0.0
  %159 = vmatprep.subr.mxu0 0.0
  %160 = vmatpush1.msra.mxu0 0.0
  %161 = vmatprep.subr.mxu0 0.0
  %162 = vmatpush1.msra.mxu0 0.0
  %163 = vmatprep.subr.mxu0 0.0
  %164 = vmatpush1.msra.mxu0 0.0
  %165 = vmatprep.subr.mxu0 0.0
  %166 = vmatpush1.msra.mxu0 0.0
  %167 = vmatprep.subr.mxu0 0.0
  %168 = vmatpush1.msra.mxu0 0.0
  %169 = vmatprep.subr.mxu0 0.0
  %170 = vmatpush1.msra.mxu0 0.0
  %171 = vmatprep.mubr.f32.mxu0 0.0
  %172 = vmatmul.mubr.f32.gmra.mrb[0].mxu0 %v102
  %v173 = vpop.f32.mrb[0].mxu0
  %v174 = vadd.f32 0.0, %v173
  %v175 = vpop.f32.mrb[0].mxu0
  %176 = vmatprep.mubr.f32.mxu0 0.0
  %177 = vmatmul.mubr.f32.gmra.mrb[0].mxu0 %v105
  %v178 = vpop.f32.mrb[0].mxu0
  %v179 = vadd.f32 0.0, %v178
  %v180 = vpop.f32.mrb[0].mxu0
  %181 = vdwg.mxu0
  %v182 = vpack.c.bf16 %v179, %v174
  %183 = vst [vmem:[%s6] sm:$0xff] %v182
  // Predicated region
  $region26: #{gat_edge_model_forward.5} parent=0 // pred_check
    _
  $region27: #{gat_edge_model_forward.5} parent=0 // pred_check_branch
    %185 = sbr.rel (0) target = $region29
  $region28: #{gat_edge_model_forward.5} parent=0 // pred_region
    _
  $region29: #{gat_edge_model_forward.5} parent=0 // pred_fallthru
    _
  // Predicated region
  $region30: #{gat_edge_model_forward.5} parent=0 // pred_check
    _
  $region31: #{gat_edge_model_forward.5} parent=0 // pred_check_branch
    %187 = sbr.rel (0) target = $region33
  $region32: #{gat_edge_model_forward.5} parent=0 // pred_region
    _
  $region33: #{gat_edge_model_forward.5} parent=0 // pred_fallthru
    _

// kernel: gat_edge_model_forward.6
$region0: #{gat_edge_model_forward.6}
  #allocation0 [shape = 'u32[]', space=smem, size = 0x4, offset = 0x4, fixed_abs, tag = 'smem constant byte address 0x4 - core index']
  #allocation1 [shape = 'u32[144,128]{1,0:T(1,128)}', space=vmem, size = 0x12000, scoped, tag = 'internal scratch']
  #allocation2 [shape = 'f32[16,128]{1,0:T(8,128)}', space=vmem, size = 0x2000, scoped, tag = 'scratch operand']
  #allocation3 [shape = 's32[1]{0}', space=sflag, size = 0x4, scoped, tag = 'scoped memory for gat_edge_model_forward.6']
  #allocation4 [shape = 's32[1]{0:T(128)S(6)}', space=smem, size = 0x200, scoped, tag = 'prefetched SMEM operand 0']
  #allocation5 [shape = 's32[1]{0:T(128)S(6)}', space=smem, size = 0x200, scoped, tag = 'prefetched SMEM operand 1']
  %s0 = inlined_call_operand.<no memory space> [shape: s32[1], index: 0, kind: input, shape index: {}]
  %s1 = inlined_call_operand.<no memory space> [shape: s32[1], index: 1, kind: input, shape index: {}]
  %s2 = inlined_call_operand.vmem [shape: s32[1,128], index: 2, kind: input, shape index: {}]
  %s3 = inlined_call_operand.vmem [shape: f32[128,4], index: 3, kind: input, shape index: {}]
  %s4 = inlined_call_operand.vmem [shape: bf16[128,128], index: 4, kind: input, shape index: {}]
  %s5 = inlined_call_operand.vmem [shape: f32[4,128], index: 5, kind: input, shape index: {}]
  %s6 = inlined_call_operand.vmem [shape: f32[128,32], index: 6, kind: input, shape index: {}]
  %s7 = inlined_call_operand.vmem [shape: f32[1,128], index: 7, kind: input, shape index: {}]
  %s8 = inlined_call_operand.vmem [shape: f32[1,32], index: 8, kind: input, shape index: {}]
  %s9 = inlined_call_operand.vmem [shape: f32[1,32], index: 9, kind: input, shape index: {}]
  %s10 = inlined_call_operand.vmem [shape: f32[16,32], index: 10, kind: output, shape index: {}]
  %s11 = sld [smem:[#allocation0]]
  $region54: #{gat_edge_model_forward.6} parent=0
    _
  %s13 = ssub.s32 1, %s11
  %s14 = scalar_select 0, %s13, %s11
  %15 = sst [smem:[#allocation4]] %s0
  %16 = sst [smem:[#allocation5]] %s1
  // Predicated region
  $region2: #{gat_edge_model_forward.6} parent=0 // pred_check
    _
  $region3: #{gat_edge_model_forward.6} parent=0 // pred_check_branch
    %18 = sbr.rel (0) target = $region5
  $region4: #{gat_edge_model_forward.6} parent=0 // pred_region
    %s19 = sld [smem:[#allocation4]]
    %s20 = sld [smem:[#allocation5]]
    %s21 = ssub.s32 %s20, 1
    %p22 = scmp.gt.s32.totalorder %s21, 0
    %s23 = scalar_select %p22, %s21, 0
    %p24 = scmp.lt.s32.totalorder 0, %s23
    %s25 = scalar_select %p24, 0, %s23
    %s26 = sadd.s32 %s19, %s25
    %p27 = scmp.lt.s32.totalorder %s26, 0
    %s28 = scalar_select %p27, %s26, 0
    %s29 = scalar_lea.vmem %s2, %s28
    %s30 = sld [smem:[#allocation4]]
    %s31 = sld [smem:[#allocation5]]
    %s32 = ssub.s32 %s31, 1
    %p33 = scmp.gt.s32.totalorder %s32, 0
    %s34 = scalar_select %p33, %s32, 0
    %p35 = scmp.lt.s32.totalorder 0, %s34
    %s36 = scalar_select %p35, 0, %s34
    %s37 = sadd.s32 %s30, %s36
  $region5: #{gat_edge_model_forward.6} parent=0 // pred_fallthru
    _
  // Predicated region
  $region6: #{gat_edge_model_forward.6} parent=0 // pred_check
    _
  $region7: #{gat_edge_model_forward.6} parent=0 // pred_check_branch
    %39 = sbr.rel (0) target = $region9
  $region8: #{gat_edge_model_forward.6} parent=0 // pred_region
    %s40 = sld [smem:[#allocation4]]
    %s41 = sld [smem:[#allocation5]]
    %s42 = ssub.s32 %s41, 1
    %p43 = scmp.gt.s32.totalorder %s42, 0
    %s44 = scalar_select %p43, %s42, 0
    %p45 = scmp.lt.s32.totalorder 0, %s44
    %s46 = scalar_select %p45, 0, %s44
    %s47 = sadd.s32 %s40, %s46
    %s48 = smul.u32 16, %s47
    %p49 = scmp.lt.s32.totalorder %s48, 15
    %s50 = scalar_select %p49, %s48, 15
    %s51 = smul.addr %s50, 8
    %s52 = scalar_lea.vmem %s3, %s51
    %s53 = sld [smem:[#allocation4]]
    %s54 = sld [smem:[#allocation5]]
    %s55 = ssub.s32 %s54, 1
    %p56 = scmp.gt.s32.totalorder %s55, 0
    %s57 = scalar_select %p56, %s55, 0
    %p58 = scmp.lt.s32.totalorder 0, %s57
    %s59 = scalar_select %p58, 0, %s57
    %s60 = sadd.s32 %s53, %s59
    %s61 = smul.u32 16, %s60
  $region9: #{gat_edge_model_forward.6} parent=0 // pred_fallthru
    _
  // Predicated region
  $region10: #{gat_edge_model_forward.6} parent=0 // pred_check
    _
  $region11: #{gat_edge_model_forward.6} parent=0 // pred_check_branch
    %63 = sbr.rel (0) target = $region13
  $region12: #{gat_edge_model_forward.6} parent=0 // pred_region
    %s64 = sld [smem:[#allocation4]]
    %s65 = sld [smem:[#allocation5]]
    %s66 = ssub.s32 %s65, 1
    %p67 = scmp.gt.s32.totalorder %s66, 0
    %s68 = scalar_select %p67, %s66, 0
    %p69 = scmp.lt.s32.totalorder 0, %s68
    %s70 = scalar_select %p69, 0, %s68
    %s71 = sadd.s32 %s64, %s70
    %s72 = smul.u32 16, %s71
    %p73 = scmp.lt.s32.totalorder %s72, 15
    %s74 = scalar_select %p73, %s72, 15
    %s75 = smul.addr %s74, 4
    %s76 = scalar_lea.vmem %s4, %s75
    %s77 = sld [smem:[#allocation4]]
    %s78 = sld [smem:[#allocation5]]
    %s79 = ssub.s32 %s78, 1
    %p80 = scmp.gt.s32.totalorder %s79, 0
    %s81 = scalar_select %p80, %s79, 0
    %p82 = scmp.lt.s32.totalorder 0, %s81
    %s83 = scalar_select %p82, 0, %s81
    %s84 = sadd.s32 %s77, %s83
    %s85 = smul.u32 16, %s84
  $region13: #{gat_edge_model_forward.6} parent=0 // pred_fallthru
    _
  // Predicated region
  $region14: #{gat_edge_model_forward.6} parent=0 // pred_check
    _
  $region15: #{gat_edge_model_forward.6} parent=0 // pred_check_branch
    %87 = sbr.rel (0) target = $region17
  $region16: #{gat_edge_model_forward.6} parent=0 // pred_region
    _
  $region17: #{gat_edge_model_forward.6} parent=0 // pred_fallthru
    _
  // Predicated region
  $region18: #{gat_edge_model_forward.6} parent=0 // pred_check
    _
  $region19: #{gat_edge_model_forward.6} parent=0 // pred_check_branch
    %89 = sbr.rel (0) target = $region21
  $region20: #{gat_edge_model_forward.6} parent=0 // pred_region
    _
  $region21: #{gat_edge_model_forward.6} parent=0 // pred_fallthru
    _
  // Predicated region
  $region22: #{gat_edge_model_forward.6} parent=0 // pred_check
    _
  $region23: #{gat_edge_model_forward.6} parent=0 // pred_check_branch
    %91 = sbr.rel (0) target = $region25
  $region24: #{gat_edge_model_forward.6} parent=0 // pred_region
    _
  $region25: #{gat_edge_model_forward.6} parent=0 // pred_fallthru
    _
  // Predicated region
  $region26: #{gat_edge_model_forward.6} parent=0 // pred_check
    _
  $region27: #{gat_edge_model_forward.6} parent=0 // pred_check_branch
    %93 = sbr.rel (0) target = $region29
  $region28: #{gat_edge_model_forward.6} parent=0 // pred_region
    _
  $region29: #{gat_edge_model_forward.6} parent=0 // pred_fallthru
    _
  // Predicated region
  $region30: #{gat_edge_model_forward.6} parent=0 // pred_check
    _
  $region31: #{gat_edge_model_forward.6} parent=0 // pred_check_branch
    %95 = sbr.rel (0) target = $region33
  $region32: #{gat_edge_model_forward.6} parent=0 // pred_region
    _
  $region33: #{gat_edge_model_forward.6} parent=0 // pred_fallthru
    _
  %s96 = sld [smem:[#allocation4]]
  %s97 = sld [smem:[#allocation5]]
  %s98 = ssub.s32 %s97, 1
  %p99 = scmp.gt.s32.totalorder %s98, 0
  %s100 = scalar_select %p99, %s98, 0
  %p101 = scmp.lt.s32.totalorder 0, %s100
  %s102 = scalar_select %p101, 0, %s100
  %s103 = sadd.s32 %s96, %s102
  %p104 = scmp.lt.s32.totalorder %s103, 0
  %s105 = scalar_select %p104, %s103, 0
  %s106 = scalar_lea.vmem %s2, %s105
  %s107 = sld [smem:[#allocation4]]
  %s108 = sld [smem:[#allocation5]]
  %s109 = ssub.s32 %s108, 1
  %p110 = scmp.gt.s32.totalorder %s109, 0
  %s111 = scalar_select %p110, %s109, 0
  %p112 = scmp.lt.s32.totalorder 0, %s111
  %s113 = scalar_select %p112, 0, %s111
  %s114 = sadd.s32 %s107, %s113
  %s115 = smul.u32 16, %s114
  %p116 = scmp.lt.s32.totalorder %s115, 15
  %s117 = scalar_select %p116, %s115, 15
  %s118 = smul.addr %s117, 8
  %s119 = scalar_lea.vmem %s3, %s118
  %s120 = sld [smem:[#allocation4]]
  %s121 = sld [smem:[#allocation5]]
  %s122 = ssub.s32 %s121, 1
  %p123 = scmp.gt.s32.totalorder %s122, 0
  %s124 = scalar_select %p123, %s122, 0
  %p125 = scmp.lt.s32.totalorder 0, %s124
  %s126 = scalar_select %p125, 0, %s124
  %s127 = sadd.s32 %s120, %s126
  %s128 = smul.u32 16, %s127
  %p129 = scmp.lt.s32.totalorder %s128, 15
  %s130 = scalar_select %p129, %s128, 15
  %s131 = smul.addr %s130, 4
  %s132 = scalar_lea.vmem %s4, %s131
  %s133 = sld [smem:[#allocation4]]
  %s134 = sld [smem:[#allocation5]]
  %s135 = ssub.s32 %s134, 1
  %p136 = scmp.gt.s32.totalorder %s135, 0
  %s137 = scalar_select %p136, %s135, 0
  %p138 = scmp.lt.s32.totalorder 0, %s137
  %s139 = scalar_select %p138, 0, %s137
  %s140 = sadd.s32 %s133, %s139
  %p141 = scmp.lt.s32.totalorder %s140, 0
  %s142 = scalar_select %p141, %s140, 0
  %s143 = scalar_lea.vmem %s2, %s142
  %s144 = sld [smem:[#allocation4]]
  %s145 = sld [smem:[#allocation5]]
  %s146 = ssub.s32 %s145, 1
  %p147 = scmp.gt.s32.totalorder %s146, 0
  %s148 = scalar_select %p147, %s146, 0
  %p149 = scmp.lt.s32.totalorder 0, %s148
  %s150 = scalar_select %p149, 0, %s148
  %s151 = sadd.s32 %s144, %s150
  %s152 = sld [smem:[#allocation4]]
  %s153 = sld [smem:[#allocation5]]
  %s154 = ssub.s32 %s153, 1
  %p155 = scmp.gt.s32.totalorder %s154, 0
  %s156 = scalar_select %p155, %s154, 0
  %p157 = scmp.lt.s32.totalorder 0, %s156
  %s158 = scalar_select %p157, 0, %s156
  %s159 = sadd.s32 %s152, %s158
  %s160 = smul.u32 16, %s159
  %p161 = scmp.lt.s32.totalorder %s160, 15
  %s162 = scalar_select %p161, %s160, 15
  %s163 = smul.addr %s162, 8
  %s164 = scalar_lea.vmem %s3, %s163
  %s165 = sld [smem:[#allocation4]]
  %s166 = sld [smem:[#allocation5]]
  %s167 = ssub.s32 %s166, 1
  %p168 = scmp.gt.s32.totalorder %s167, 0
  %s169 = scalar_select %p168, %s167, 0
  %p170 = scmp.lt.s32.totalorder 0, %s169
  %s171 = scalar_select %p170, 0, %s169
  %s172 = sadd.s32 %s165, %s171
  %s173 = smul.u32 16, %s172
  %s174 = sld [smem:[#allocation4]]
  %s175 = sld [smem:[#allocation5]]
  %s176 = ssub.s32 %s175, 1
  %p177 = scmp.gt.s32.totalorder %s176, 0
  %s178 = scalar_select %p177, %s176, 0
  %p179 = scmp.lt.s32.totalorder 0, %s178
  %s180 = scalar_select %p179, 0, %s178
  %s181 = sadd.s32 %s174, %s180
  %s182 = smul.u32 16, %s181
  %p183 = scmp.lt.s32.totalorder %s182, 15
  %s184 = scalar_select %p183, %s182, 15
  %s185 = smul.addr %s184, 4
  %s186 = scalar_lea.vmem %s4, %s185
  %s187 = sld [smem:[#allocation4]]
  %s188 = sld [smem:[#allocation5]]
  %s189 = ssub.s32 %s188, 1
  %p190 = scmp.gt.s32.totalorder %s189, 0
  %s191 = scalar_select %p190, %s189, 0
  %p192 = scmp.lt.s32.totalorder 0, %s191
  %s193 = scalar_select %p192, 0, %s191
  %s194 = sadd.s32 %s187, %s193
  %s195 = smul.u32 16, %s194
  %p197 = scmp.eq.s32.totalorder 0, 0
  // Predicated region
  $region34: #{gat_edge_model_forward.6} parent=0 // pred_check
    %p198 = pneg %p197
  $region35: #{gat_edge_model_forward.6} parent=0 // pred_check_branch
    %200 = sbr.rel (%p198) target = $region37
  $region36: #{gat_edge_model_forward.6} parent=0 // pred_region
    %201 = vst [vmem:[#allocation2] sm:$0xff] 0.0
    %202 = vst [vmem:[#allocation2 + $0x8] sm:$0xff] 0.0
  $region37: #{gat_edge_model_forward.6} parent=0 // pred_fallthru
    _
  %s203 = sld [smem:[#allocation5]]
  %p204 = scmp.lt.s32.totalorder 0, %s203
  // Predicated region
  $region38: #{gat_edge_model_forward.6} parent=0 // pred_check
    %p205 = pneg %p204
  $region39: #{gat_edge_model_forward.6} parent=0 // pred_check_branch
    %207 = sbr.rel (%p205) target = $region41
  $region40: #{gat_edge_model_forward.6} parent=0 // pred_region
    %v208 = vld [vmem:[%s143] sm:$0x1]
    %v209 = vld [vmem:[%s164] sm:$0xff]
    %v210 = vld [vmem:[%s164 + $0x8] sm:$0xff]
    %v211 = vld [vmem:[%s164 + $0x10] sm:$0xff]
    %v212 = vld [vmem:[%s164 + $0x18] sm:$0xff]
    %v213 = vld [vmem:[%s164 + $0x20] sm:$0xff]
    %v214 = vld [vmem:[%s164 + $0x28] sm:$0xff]
    %v215 = vld [vmem:[%s164 + $0x30] sm:$0xff]
    %v216 = vld [vmem:[%s164 + $0x38] sm:$0xff]
    %v217 = vld [vmem:[%s164 + $0x40] sm:$0xff]
    %v218 = vld [vmem:[%s164 + $0x48] sm:$0xff]
    %v219 = vld [vmem:[%s164 + $0x50] sm:$0xff]
    %v220 = vld [vmem:[%s164 + $0x58] sm:$0xff]
    %v221 = vld [vmem:[%s164 + $0x60] sm:$0xff]
    %v222 = vld [vmem:[%s164 + $0x68] sm:$0xff]
    %v223 = vld [vmem:[%s164 + $0x70] sm:$0xff]
    %v224 = vld [vmem:[%s164 + $0x78] sm:$0xff]
    %v225 = vld [vmem:[%s5] sm:$0xf]
    %vm226 = vcmask 31744
    %v228 = vsel %vm226, %v209, 0
    %v231 = vsel %vm226, %v210, 0
    %v234 = vsel %vm226, %v211, 0
    %v237 = vsel %vm226, %v212, 0
    %v240 = vsel %vm226, %v213, 0
    %v243 = vsel %vm226, %v214, 0
    %v246 = vsel %vm226, %v215, 0
    %v249 = vsel %vm226, %v216, 0
    %v252 = vsel %vm226, %v217, 0
    %v255 = vsel %vm226, %v218, 0
    %v258 = vsel %vm226, %v219, 0
    %v261 = vsel %vm226, %v220, 0
    %v264 = vsel %vm226, %v221, 0
    %v267 = vsel %vm226, %v222, 0
    %v270 = vsel %vm226, %v223, 0
    %v273 = vsel %vm226, %v224, 0
    %vm275 = vcmask 1043456
    %v277 = vsel %vm275, %v225, 0
    %279 = vmatprep.subr.mxu0 0.0
    %280 = vmatpush1.msra.mxu0 %v277
    %281 = vmatprep.subr.mxu0 0.0
    %282 = vmatpush1.msra.mxu0 0.0
    %283 = vmatprep.subr.mxu0 0.0
    %284 = vmatpush1.msra.mxu0 0.0
    %285 = vmatprep.subr.mxu0 0.0
    %286 = vmatpush1.msra.mxu0 0.0
    %287 = vmatprep.subr.mxu0 0.0
    %288 = vmatpush1.msra.mxu0 0.0
    %289 = vmatprep.subr.mxu0 0.0
    %290 = vmatpush1.msra.mxu0 0.0
    %291 = vmatprep.subr.mxu0 0.0
    %292 = vmatpush1.msra.mxu0 0.0
    %293 = vmatprep.subr.mxu0 0.0
    %294 = vmatpush1.msra.mxu0 0.0
    %295 = vmatprep.subr.mxu0 0.0
    %296 = vmatpush1.msra.mxu0 0.0
    %297 = vmatprep.subr.mxu0 0.0
    %298 = vmatpush1.msra.mxu0 0.0
    %299 = vmatprep.subr.mxu0 0.0
    %300 = vmatpush1.msra.mxu0 0.0
    %301 = vmatprep.subr.mxu0 0.0
    %302 = vmatpush1.msra.mxu0 0.0
    %303 = vmatprep.subr.mxu0 0.0
    %304 = vmatpush1.msra.mxu0 0.0
    %305 = vmatprep.subr.mxu0 0.0
    %306 = vmatpush1.msra.mxu0 0.0
    %307 = vmatprep.subr.mxu0 0.0
    %308 = vmatpush1.msra.mxu0 0.0
    %309 = vmatprep.subr.mxu0 0.0
    %310 = vmatpush1.msra.mxu0 0.0
    %311 = vmatprep.subr.mxu0 0.0
    %312 = vmatpush1.msra.mxu0 0.0
    %313 = vmatprep.subr.mxu0 0.0
    %314 = vmatpush1.msra.mxu0 0.0
    %315 = vmatprep.subr.mxu0 0.0
    %316 = vmatpush1.msra.mxu0 0.0
    %317 = vmatprep.subr.mxu0 0.0
    %318 = vmatpush1.msra.mxu0 0.0
    %319 = vmatprep.subr.mxu0 0.0
    %320 = vmatpush1.msra.mxu0 0.0
    %321 = vmatprep.subr.mxu0 0.0
    %322 = vmatpush1.msra.mxu0 0.0
    %323 = vmatprep.subr.mxu0 0.0
    %324 = vmatpush1.msra.mxu0 0.0
    %325 = vmatprep.subr.mxu0 0.0
    %326 = vmatpush1.msra.mxu0 0.0
    %327 = vmatprep.subr.mxu0 0.0
    %328 = vmatpush1.msra.mxu0 0.0
    %329 = vmatprep.subr.mxu0 0.0
    %330 = vmatpush1.msra.mxu0 0.0
    %331 = vmatprep.subr.mxu0 0.0
    %332 = vmatpush1.msra.mxu0 0.0
    %333 = vmatprep.subr.mxu0 0.0
    %334 = vmatpush1.msra.mxu0 0.0
    %335 = vmatprep.subr.mxu0 0.0
    %336 = vmatpush1.msra.mxu0 0.0
    %337 = vmatprep.subr.mxu0 0.0
    %338 = vmatpush1.msra.mxu0 0.0
    %339 = vmatprep.subr.mxu0 0.0
    %340 = vmatpush1.msra.mxu0 0.0
    %341 = vmatprep.subr.mxu0 0.0
    %342 = vmatpush1.msra.mxu0 0.0
    %343 = vmatprep.mubr.f32.mxu0 0.0
    %344 = vmatmul.mubr.f32.gmra.mrb[0].mxu0 %v228
    %v345 = vpop.f32.mrb[0].mxu0
    %v346 = vadd.f32 0.0, %v345
    %v347 = vpop.f32.mrb[0].mxu0
    %348 = vmatprep.mubr.f32.mxu0 0.0
    %349 = vmatmul.mubr.f32.gmra.mrb[0].mxu0 %v231
    %v350 = vpop.f32.mrb[0].mxu0
    %v351 = vadd.f32 0.0, %v350
    %v352 = vpop.f32.mrb[0].mxu0
    %353 = vmatprep.mubr.f32.mxu0 0.0
    %354 = vmatmul.mubr.f32.gmra.mrb[0].mxu0 %v234
    %v355 = vpop.f32.mrb[0].mxu0
    %v356 = vadd.f32 0.0, %v355
    %v357 = vpop.f32.mrb[0].mxu0
    %358 = vmatprep.mubr.f32.mxu0 0.0
    %359 = vmatmul.mubr.f32.gmra.mrb[0].mxu0 %v237
    %v360 = vpop.f32.mrb[0].mxu0
    %v361 = vadd.f32 0.0, %v360
    %v362 = vpop.f32.mrb[0].mxu0
    %363 = vmatprep.mubr.f32.mxu0 0.0
    %364 = vmatmul.mubr.f32.gmra.mrb[0].mxu0 %v240
    %v365 = vpop.f32.mrb[0].mxu0
    %v366 = vadd.f32 0.0, %v365
    %v367 = vpop.f32.mrb[0].mxu0
    %368 = vmatprep.mubr.f32.mxu0 0.0
    %369 = vmatmul.mubr.f32.gmra.mrb[0].mxu0 %v243
    %v370 = vpop.f32.mrb[0].mxu0
    %v371 = vadd.f32 0.0, %v370
    %v372 = vpop.f32.mrb[0].mxu0
    %373 = vmatprep.mubr.f32.mxu0 0.0
    %374 = vmatmul.mubr.f32.gmra.mrb[0].mxu0 %v246
    %v375 = vpop.f32.mrb[0].mxu0
    %v376 = vadd.f32 0.0, %v375
    %v377 = vpop.f32.mrb[0].mxu0
    %378 = vmatprep.mubr.f32.mxu0 0.0
    %379 = vmatmul.mubr.f32.gmra.mrb[0].mxu0 %v249
    %v380 = vpop.f32.mrb[0].mxu0
    %v381 = vadd.f32 0.0, %v380
    %v382 = vpop.f32.mrb[0].mxu0
    %383 = vmatprep.mubr.f32.mxu0 0.0
    %384 = vmatmul.mubr.f32.gmra.mrb[0].mxu0 %v252
    %v385 = vpop.f32.mrb[0].mxu0
    %v386 = vadd.f32 0.0, %v385
    %v387 = vpop.f32.mrb[0].mxu0
    %388 = vmatprep.mubr.f32.mxu0 0.0
    %389 = vmatmul.mubr.f32.gmra.mrb[0].mxu0 %v255
    %v390 = vpop.f32.mrb[0].mxu0
    %v391 = vadd.f32 0.0, %v390
    %v392 = vpop.f32.mrb[0].mxu0
    %393 = vmatprep.mubr.f32.mxu0 0.0
    %394 = vmatmul.mubr.f32.gmra.mrb[0].mxu0 %v258
    %v395 = vpop.f32.mrb[0].mxu0
    %v396 = vadd.f32 0.0, %v395
    %v397 = vpop.f32.mrb[0].mxu0
    %398 = vmatprep.mubr.f32.mxu0 0.0
    %399 = vmatmul.mubr.f32.gmra.mrb[0].mxu0 %v261
    %v400 = vpop.f32.mrb[0].mxu0
    %v401 = vadd.f32 0.0, %v400
    %v402 = vpop.f32.mrb[0].mxu0
    %403 = vmatprep.mubr.f32.mxu0 0.0
    %404 = vmatmul.mubr.f32.gmra.mrb[0].mxu0 %v264
    %v405 = vpop.f32.mrb[0].mxu0
    %v406 = vadd.f32 0.0, %v405
    %v407 = vpop.f32.mrb[0].mxu0
    %408 = vmatprep.mubr.f32.mxu0 0.0
    %409 = vmatmul.mubr.f32.gmra.mrb[0].mxu0 %v267
    %v410 = vpop.f32.mrb[0].mxu0
    %v411 = vadd.f32 0.0, %v410
    %v412 = vpop.f32.mrb[0].mxu0
    %413 = vmatprep.mubr.f32.mxu0 0.0
    %414 = vmatmul.mubr.f32.gmra.mrb[0].mxu0 %v270
    %v415 = vpop.f32.mrb[0].mxu0
    %v416 = vadd.f32 0.0, %v415
    %v417 = vpop.f32.mrb[0].mxu0
    %418 = vmatprep.mubr.f32.mxu0 0.0
    %419 = vmatmul.mubr.f32.gmra.mrb[0].mxu0 %v273
    %v420 = vpop.f32.mrb[0].mxu0
    %v421 = vadd.f32 0.0, %v420
    %v422 = vpop.f32.mrb[0].mxu0
    %423 = vdwg.mxu0
    %v424 = vld [vmem:[%s186] sm:$0xf]
    %v425 = vld [vmem:[%s186 + $0x4] sm:$0xf]
    %v426 = vld [vmem:[%s186 + $0x8] sm:$0xf]
    %v427 = vld [vmem:[%s186 + $0xc] sm:$0xf]
    %v428 = vld [vmem:[%s186 + $0x10] sm:$0xf]
    %v429 = vld [vmem:[%s186 + $0x14] sm:$0xf]
    %v430 = vld [vmem:[%s186 + $0x18] sm:$0xf]
    %v431 = vld [vmem:[%s186 + $0x1c] sm:$0xf]
    %v432 = vld [vmem:[%s186 + $0x20] sm:$0xf]
    %v433 = vld [vmem:[%s186 + $0x24] sm:$0xf]
    %v434 = vld [vmem:[%s186 + $0x28] sm:$0xf]
    %v435 = vld [vmem:[%s186 + $0x2c] sm:$0xf]
    %v436 = vld [vmem:[%s186 + $0x30] sm:$0xf]
    %v437 = vld [vmem:[%s186 + $0x34] sm:$0xf]
    %v438 = vld [vmem:[%s186 + $0x38] sm:$0xf]
    %v439 = vld [vmem:[%s186 + $0x3c] sm:$0xf]
    %v440 = vunpack.c.l.bf16 %v424
    %v441 = vunpack.c.l.bf16 %v425
    %v442 = vunpack.c.l.bf16 %v426
    %v443 = vunpack.c.l.bf16 %v427
    %v444 = vunpack.c.l.bf16 %v428
    %v445 = vunpack.c.l.bf16 %v429
    %v446 = vunpack.c.l.bf16 %v430
    %v447 = vunpack.c.l.bf16 %v431
    %v448 = vunpack.c.l.bf16 %v432
    %v449 = vunpack.c.l.bf16 %v433
    %v450 = vunpack.c.l.bf16 %v434
    %v451 = vunpack.c.l.bf16 %v435
    %v452 = vunpack.c.l.bf16 %v436
    %v453 = vunpack.c.l.bf16 %v437
    %v454 = vunpack.c.l.bf16 %v438
    %v455 = vunpack.c.l.bf16 %v439
    %v456 = vmul.f32 %v346, %v440
    %v457 = vmul.f32 %v351, %v441
    %v458 = vmul.f32 %v356, %v442
    %v459 = vmul.f32 %v361, %v443
    %v460 = vmul.f32 %v366, %v444
    %v461 = vmul.f32 %v371, %v445
    %v462 = vmul.f32 %v376, %v446
    %v463 = vmul.f32 %v381, %v447
    %v464 = vmul.f32 %v386, %v448
    %v465 = vmul.f32 %v391, %v449
    %v466 = vmul.f32 %v396, %v450
    %v467 = vmul.f32 %v401, %v451
    %v468 = vmul.f32 %v406, %v452
    %v469 = vmul.f32 %v411, %v453
    %v470 = vmul.f32 %v416, %v454
    %v471 = vmul.f32 %v421, %v455
    %v472 = vpack.c.bf16 %v457, %v456
    %v473 = vpack.c.bf16 %v459, %v458
    %v474 = vpack.c.bf16 %v461, %v460
    %v475 = vpack.c.bf16 %v463, %v462
    %v476 = vpack.c.bf16 %v465, %v464
    %v477 = vpack.c.bf16 %v467, %v466
    %v478 = vpack.c.bf16 %v469, %v468
    %v479 = vpack.c.bf16 %v471, %v470
    %v480 = vlaneseq
    %v481 = vshrl.u32 %v480, 7
    %v482 = vadd.s32 %v481, 8
    %s483 = smul.u32 0, 16
    %v484 = vstv %s483
    %v485 = vadd.s32 %v481, %v484
    %v486 = vadd.s32 %v482, %v484
    %v487 = vlaneseq
    %v488 = vshrl.u32 %v487, 7
    %v489 = vsub.s32 0, %v488
    %v490 = vrot.slane %v208, %v489
    %vm491 = vcmp.eq.s32.totalorder %v485, %v490
    %vm492 = vcmp.eq.s32.totalorder %v486, %v490
    %v493 = vsel %vm491, 1.0, 0.0
    %v494 = vsel %vm492, 1.0, 0.0
    %v495 = vpack.c.bf16 %v494, %v493
    %v496 = vld [vmem:[#allocation2] sm:$0xff]
    %v497 = vld [vmem:[#allocation2 + $0x8] sm:$0xff]
    %498 = vmatprep.subr.bf16.mxu0 0
    %499 = vmatpush1.bf16.msra.mxu0 %v472
    %500 = vmatprep.subr.bf16.mxu0 0
    %501 = vmatpush1.bf16.msra.mxu0 %v473
    %502 = vmatprep.subr.bf16.mxu0 0
    %503 = vmatpush1.bf16.msra.mxu0 %v474
    %504 = vmatprep.subr.bf16.mxu0 0
    %505 = vmatpush1.bf16.msra.mxu0 %v475
    %506 = vmatprep.subr.bf16.mxu0 0
    %507 = vmatpush1.bf16.msra.mxu0 %v476
    %508 = vmatprep.subr.bf16.mxu0 0
    %509 = vmatpush1.bf16.msra.mxu0 %v477
    %510 = vmatprep.subr.bf16.mxu0 0
    %511 = vmatpush1.bf16.msra.mxu0 %v478
    %512 = vmatprep.subr.bf16.mxu0 0
    %513 = vmatpush1.bf16.msra.mxu0 %v479
    %514 = vmatprep.subr.bf16.mxu0 0
    %515 = vmatpush1.bf16.msra.mxu0 0
    %516 = vmatprep.subr.bf16.mxu0 0
    %517 = vmatpush1.bf16.msra.mxu0 0
    %518 = vmatprep.subr.bf16.mxu0 0
    %519 = vmatpush1.bf16.msra.mxu0 0
    %520 = vmatprep.subr.bf16.mxu0 0
    %521 = vmatpush1.bf16.msra.mxu0 0
    %522 = vmatprep.subr.bf16.mxu0 0
    %523 = vmatpush1.bf16.msra.mxu0 0
    %524 = vmatprep.subr.bf16.mxu0 0
    %525 = vmatpush1.bf16.msra.mxu0 0
    %526 = vmatprep.subr.bf16.mxu0 0
    %527 = vmatpush1.bf16.msra.mxu0 0
    %528 = vmatprep.subr.bf16.mxu0 0
    %529 = vmatpush1.bf16.msra.mxu0 0
    %530 = vmatprep.mubr.bf16.mxu0 0
    %531 = vmatmul.mubr.bf16.gmra.mrb[0].mxu0 %v495
    %v532 = vpop.f32.mrb[0].mxu0
    %v533 = vadd.f32 0.0, %v532
    %v534 = vpop.f32.mrb[0].mxu0
    %v535 = vpop.f32.mrb[0].mxu0
    %v536 = vadd.f32 0.0, %v535
    %v537 = vpop.f32.mrb[0].mxu0
    %538 = vdwg.mxu0
    %v539 = vadd.f32 %v496, %v533
    %v540 = vadd.f32 %v497, %v536
    %541 = vst [vmem:[#allocation2] sm:$0xff] %v539
    %542 = vst [vmem:[#allocation2 + $0x8] sm:$0xff] %v540
  $region41: #{gat_edge_model_forward.6} parent=0 // pred_fallthru
    _
  // Predicated region
  $region42: #{gat_edge_model_forward.6} parent=0 // pred_check
    %p543 = pneg %p197
  $region43: #{gat_edge_model_forward.6} parent=0 // pred_check_branch
    %545 = sbr.rel (%p543) target = $region45
  $region44: #{gat_edge_model_forward.6} parent=0 // pred_region
    %v546 = vld [vmem:[#allocation2] sm:$0xff]
    %v547 = vld [vmem:[#allocation2 + $0x8] sm:$0xff]
    %v548 = vld [vmem:[%s7] sm:$0x1]
    %v550 = vlaneseq
    %v551 = vshrl.u32 %v550, 7
    %v552 = vsub.s32 0, %v551
    %v553 = vrot.slane %v548, %v552
    %v555 = vadd.f32 %v546, %v553
    %v556 = vadd.f32 %v547, %v553
    %v557 = vld [vmem:[%s6] sm:$0xff]
    %v558 = vld [vmem:[%s6 + $0x8] sm:$0xff]
    %v559 = vld [vmem:[%s6 + $0x10] sm:$0xff]
    %v560 = vld [vmem:[%s6 + $0x18] sm:$0xff]
    %v561 = vld [vmem:[%s6 + $0x20] sm:$0xff]
    %v562 = vld [vmem:[%s6 + $0x28] sm:$0xff]
    %v563 = vld [vmem:[%s6 + $0x30] sm:$0xff]
    %v564 = vld [vmem:[%s6 + $0x38] sm:$0xff]
    %v565 = vld [vmem:[%s6 + $0x40] sm:$0xff]
    %v566 = vld [vmem:[%s6 + $0x48] sm:$0xff]
    %v567 = vld [vmem:[%s6 + $0x50] sm:$0xff]
    %v568 = vld [vmem:[%s6 + $0x58] sm:$0xff]
    %v569 = vld [vmem:[%s6 + $0x60] sm:$0xff]
    %v570 = vld [vmem:[%s6 + $0x68] sm:$0xff]
    %v571 = vld [vmem:[%s6 + $0x70] sm:$0xff]
    %v572 = vld [vmem:[%s6 + $0x78] sm:$0xff]
    %573 = vmatprep.subr.mxu0 0.0
    %574 = vmatpush1.msra.mxu0 %v557
    %575 = vmatprep.subr.mxu0 0.0
    %576 = vmatpush1.msra.mxu0 %v558
    %577 = vmatprep.subr.mxu0 0.0
    %578 = vmatpush1.msra.mxu0 %v559
    %579 = vmatprep.subr.mxu0 0.0
    %580 = vmatpush1.msra.mxu0 %v560
    %581 = vmatprep.subr.mxu0 0.0
    %582 = vmatpush1.msra.mxu0 %v561
    %583 = vmatprep.subr.mxu0 0.0
    %584 = vmatpush1.msra.mxu0 %v562
    %585 = vmatprep.subr.mxu0 0.0
    %586 = vmatpush1.msra.mxu0 %v563
    %587 = vmatprep.subr.mxu0 0.0
    %588 = vmatpush1.msra.mxu0 %v564
    %589 = vmatprep.subr.mxu0 0.0
    %590 = vmatpush1.msra.mxu0 %v565
    %591 = vmatprep.subr.mxu0 0.0
    %592 = vmatpush1.msra.mxu0 %v566
    %593 = vmatprep.subr.mxu0 0.0
    %594 = vmatpush1.msra.mxu0 %v567
    %595 = vmatprep.subr.mxu0 0.0
    %596 = vmatpush1.msra.mxu0 %v568
    %597 = vmatprep.subr.mxu0 0.0
    %598 = vmatpush1.msra.mxu0 %v569
    %599 = vmatprep.subr.mxu0 0.0
    %600 = vmatpush1.msra.mxu0 %v570
    %601 = vmatprep.subr.mxu0 0.0
    %602 = vmatpush1.msra.mxu0 %v571
    %603 = vmatprep.subr.mxu0 0.0
    %604 = vmatpush1.msra.mxu0 %v572
    %605 = vmatprep.subr.mxu0 0.0
    %606 = vmatpush1.msra.mxu0 0.0
    %607 = vmatprep.subr.mxu0 0.0
    %608 = vmatpush1.msra.mxu0 0.0
    %609 = vmatprep.subr.mxu0 0.0
    %610 = vmatpush1.msra.mxu0 0.0
    %611 = vmatprep.subr.mxu0 0.0
    %612 = vmatpush1.msra.mxu0 0.0
    %613 = vmatprep.subr.mxu0 0.0
    %614 = vmatpush1.msra.mxu0 0.0
    %615 = vmatprep.subr.mxu0 0.0
    %616 = vmatpush1.msra.mxu0 0.0
    %617 = vmatprep.subr.mxu0 0.0
    %618 = vmatpush1.msra.mxu0 0.0
    %619 = vmatprep.subr.mxu0 0.0
    %620 = vmatpush1.msra.mxu0 0.0
    %621 = vmatprep.subr.mxu0 0.0
    %622 = vmatpush1.msra.mxu0 0.0
    %623 = vmatprep.subr.mxu0 0.0
    %624 = vmatpush1.msra.mxu0 0.0
    %625 = vmatprep.subr.mxu0 0.0
    %626 = vmatpush1.msra.mxu0 0.0
    %627 = vmatprep.subr.mxu0 0.0
    %628 = vmatpush1.msra.mxu0 0.0
    %629 = vmatprep.subr.mxu0 0.0
    %630 = vmatpush1.msra.mxu0 0.0
    %631 = vmatprep.subr.mxu0 0.0
    %632 = vmatpush1.msra.mxu0 0.0
    %633 = vmatprep.subr.mxu0 0.0
    %634 = vmatpush1.msra.mxu0 0.0
    %635 = vmatprep.subr.mxu0 0.0
    %636 = vmatpush1.msra.mxu0 0.0
    %637 = vmatprep.mubr.f32.mxu0 0.0
    %638 = vmatmul.mubr.f32.gmra.mrb[0].mxu0 %v555
    %v639 = vpop.f32.mrb[0].mxu0
    %v640 = vadd.f32 0.0, %v639
    %v641 = vpop.f32.mrb[0].mxu0
    %642 = vmatprep.mubr.f32.mxu0 0.0
    %643 = vmatmul.mubr.f32.gmra.mrb[0].mxu0 %v556
    %v644 = vpop.f32.mrb[0].mxu0
    %v645 = vadd.f32 0.0, %v644
    %v646 = vpop.f32.mrb[0].mxu0
    %647 = vdwg.mxu0
    %vm648 = vcmask 261120
    %v649 = vsel %vm648, %v640, 0.0
    %650 = vadd.xlane.f32.xlu0 %v649
    %v651 = vpop.xlane.xlu0 %650
    %v652 = vsel %vm648, %v645, 0.0
    %653 = vadd.xlane.f32.xlu0 %v652
    %v654 = vpop.xlane.xlu0 %653
    %v655 = vrcp.pop 32.0
    %v656 = vmul.f32 %v651, %v655
    %v657 = vmul.f32 %v654, %v655
    %v658 = vsub.f32 %v640, %v656
    %v659 = vsub.f32 %v645, %v657
    %v660 = vmul.f32 %v658, %v658
    %v661 = vmul.f32 %v659, %v659
    %v662 = vsel %vm648, %v660, 0.0
    %663 = vadd.xlane.f32.xlu0 %v662
    %v664 = vpop.xlane.xlu0 %663
    %v665 = vsel %vm648, %v661, 0.0
    %666 = vadd.xlane.f32.xlu0 %v665
    %v667 = vpop.xlane.xlu0 %666
    %v668 = vmul.f32 %v664, %v655
    %v669 = vmul.f32 %v667, %v655
    %v670 = vadd.f32 %v668, 1e-05
    %v671 = vadd.f32 %v669, 1e-05
    %v672 = vrsqrt.pop %v670
    %v673 = vrsqrt.pop %v671
    %v674 = vmul.f32 %v658, %v672
    %v675 = vmul.f32 %v659, %v673
    %v676 = vld [vmem:[%s8] sm:$0x1]
    %v678 = vlaneseq
    %v679 = vshrl.u32 %v678, 7
    %v680 = vsub.s32 0, %v679
    %v681 = vrot.slane %v676, %v680
    %v683 = vmul.f32 %v674, %v681
    %v684 = vmul.f32 %v675, %v681
    %v685 = vld [vmem:[%s9] sm:$0x1]
    %v687 = vlaneseq
    %v688 = vshrl.u32 %v687, 7
    %v689 = vsub.s32 0, %v688
    %v690 = vrot.slane %v685, %v689
    %v692 = vadd.f32 %v683, %v690
    %v693 = vadd.f32 %v684, %v690
    %v694 = vmax.f32 %v692, 0.0
    %v695 = vmax.f32 %v693, 0.0
    %696 = vst.msk [vmem:[%s10] sm:$0xff] %vm648, %v694
    %697 = vst.msk [vmem:[%s10 + $0x8] sm:$0xff] %vm648, %v695
  $region45: #{gat_edge_model_forward.6} parent=0 // pred_fallthru
    _
  // Predicated region
  $region46: #{gat_edge_model_forward.6} parent=0 // pred_check
    _
  $region47: #{gat_edge_model_forward.6} parent=0 // pred_check_branch
    %699 = sbr.rel (0) target = $region49
  $region48: #{gat_edge_model_forward.6} parent=0 // pred_region
    _
  $region49: #{gat_edge_model_forward.6} parent=0 // pred_fallthru
    _
  // Predicated region
  $region50: #{gat_edge_model_forward.6} parent=0 // pred_check
    _
  $region51: #{gat_edge_model_forward.6} parent=0 // pred_check_branch
    %701 = sbr.rel (0) target = $region53
  $region52: #{gat_edge_model_forward.6} parent=0 // pred_region
    _
  $region53: #{gat_edge_model_forward.6} parent=0 // pred_fallthru
    _

// kernel: gat_edge_model_forward.9
$region0: #{gat_edge_model_forward.9}
  #allocation0 [shape = 'u32[]', space=smem, size = 0x4, offset = 0x4, fixed_abs, tag = 'smem constant byte address 0x4 - core index']
  #allocation1 [shape = 'u32[144,128]{1,0:T(1,128)}', space=vmem, size = 0x12000, scoped, tag = 'internal scratch']
  %s0 = inlined_call_operand.vmem [shape: f32[2,64], index: 0, kind: input, shape index: {}]
  %s1 = inlined_call_operand.vmem [shape: f32[64,64], index: 1, kind: input, shape index: {}]
  %s2 = inlined_call_operand.vmem [shape: f32[1,64], index: 2, kind: input, shape index: {}]
  %s3 = inlined_call_operand.vmem [shape: f32[64,32], index: 3, kind: input, shape index: {}]
  %s4 = inlined_call_operand.vmem [shape: f32[1,32], index: 4, kind: input, shape index: {}]
  %s5 = inlined_call_operand.vmem [shape: f32[32,4], index: 5, kind: input, shape index: {}]
  %s6 = inlined_call_operand.vmem [shape: f32[1,4], index: 6, kind: input, shape index: {}]
  %s7 = inlined_call_operand.hbm [shape: f32[2,4], index: 7, kind: output, shape index: {}]
  %s8 = sld [smem:[#allocation0]]
  $region38: #{gat_edge_model_forward.9} parent=0
    _
  %s10 = ssub.s32 1, %s8
  %s11 = scalar_select 0, %s10, %s8
  $region1: #{gat_edge_model_forward.9} parent=0
    #allocation2 [shape = 'u8[1024]{0}', space=vmem, size = 0x400, scoped, tag = 'output window, operand 0, single buffered']
    #allocation3 [shape = 's32[1]{0}', space=sflag, size = 0x4, scoped, tag = 'scoped memory for gat_edge_model_forward.9']
    %12 = vsyncpa [#allocation3], 0
    // Predicated region
    $region2: #{gat_edge_model_forward.9} parent=1 // pred_check
      _
    $region3: #{gat_edge_model_forward.9} parent=1 // pred_check_branch
      %14 = sbr.rel (0) target = $region5
    $region4: #{gat_edge_model_forward.9} parent=1 // pred_region
      _
    $region5: #{gat_edge_model_forward.9} parent=1 // pred_fallthru
      _
    // Predicated region
    $region6: #{gat_edge_model_forward.9} parent=1 // pred_check
      _
    $region7: #{gat_edge_model_forward.9} parent=1 // pred_check_branch
      %16 = sbr.rel (0) target = $region9
    $region8: #{gat_edge_model_forward.9} parent=1 // pred_region
      _
    $region9: #{gat_edge_model_forward.9} parent=1 // pred_fallthru
      _
    // Predicated region
    $region10: #{gat_edge_model_forward.9} parent=1 // pred_check
      _
    $region11: #{gat_edge_model_forward.9} parent=1 // pred_check_branch
      %18 = sbr.rel (0) target = $region13
    $region12: #{gat_edge_model_forward.9} parent=1 // pred_region
      _
    $region13: #{gat_edge_model_forward.9} parent=1 // pred_fallthru
      _
    // Predicated region
    $region14: #{gat_edge_model_forward.9} parent=1 // pred_check
      _
    $region15: #{gat_edge_model_forward.9} parent=1 // pred_check_branch
      %20 = sbr.rel (0) target = $region17
    $region16: #{gat_edge_model_forward.9} parent=1 // pred_region
      _
    $region17: #{gat_edge_model_forward.9} parent=1 // pred_fallthru
      _
    // Predicated region
    $region18: #{gat_edge_model_forward.9} parent=1 // pred_check
      _
    $region19: #{gat_edge_model_forward.9} parent=1 // pred_check_branch
      %22 = sbr.rel (0) target = $region21
    $region20: #{gat_edge_model_forward.9} parent=1 // pred_region
      _
    $region21: #{gat_edge_model_forward.9} parent=1 // pred_fallthru
      _
    // Predicated region
    $region22: #{gat_edge_model_forward.9} parent=1 // pred_check
      _
    $region23: #{gat_edge_model_forward.9} parent=1 // pred_check_branch
      %24 = sbr.rel (0) target = $region25
    $region24: #{gat_edge_model_forward.9} parent=1 // pred_region
      _
    $region25: #{gat_edge_model_forward.9} parent=1 // pred_fallthru
      _
    // Predicated region
    $region26: #{gat_edge_model_forward.9} parent=1 // pred_check
      _
    $region27: #{gat_edge_model_forward.9} parent=1 // pred_check_branch
      %26 = sbr.rel (0) target = $region29
    $region28: #{gat_edge_model_forward.9} parent=1 // pred_region
      _
    $region29: #{gat_edge_model_forward.9} parent=1 // pred_fallthru
      _
    %v27 = vld [vmem:[%s0] sm:$0x3]
    %v28 = vld [vmem:[%s1] sm:$0xff]
    %v29 = vld [vmem:[%s1 + $0x8] sm:$0xff]
    %v30 = vld [vmem:[%s1 + $0x10] sm:$0xff]
    %v31 = vld [vmem:[%s1 + $0x18] sm:$0xff]
    %v32 = vld [vmem:[%s1 + $0x20] sm:$0xff]
    %v33 = vld [vmem:[%s1 + $0x28] sm:$0xff]
    %v34 = vld [vmem:[%s1 + $0x30] sm:$0xff]
    %v35 = vld [vmem:[%s1 + $0x38] sm:$0xff]
    %v36 = vld [vmem:[%s2] sm:$0x1]
    %v38 = vlaneseq
    %v39 = vshrl.u32 %v38, 7
    %v40 = vsub.s32 0, %v39
    %v41 = vrot.slane %v36, %v40
    %vm43 = vcmask 523264
    %v45 = vsel %vm43, %v27, 0
    %47 = vmatprep.subr.mxu0 0.0
    %48 = vmatpush1.msra.mxu0 %v28
    %49 = vmatprep.subr.mxu0 0.0
    %50 = vmatpush1.msra.mxu0 %v29
    %51 = vmatprep.subr.mxu0 0.0
    %52 = vmatpush1.msra.mxu0 %v30
    %53 = vmatprep.subr.mxu0 0.0
    %54 = vmatpush1.msra.mxu0 %v31
    %55 = vmatprep.subr.mxu0 0.0
    %56 = vmatpush1.msra.mxu0 %v32
    %57 = vmatprep.subr.mxu0 0.0
    %58 = vmatpush1.msra.mxu0 %v33
    %59 = vmatprep.subr.mxu0 0.0
    %60 = vmatpush1.msra.mxu0 %v34
    %61 = vmatprep.subr.mxu0 0.0
    %62 = vmatpush1.msra.mxu0 %v35
    %63 = vmatprep.subr.mxu0 0.0
    %64 = vmatpush1.msra.mxu0 0.0
    %65 = vmatprep.subr.mxu0 0.0
    %66 = vmatpush1.msra.mxu0 0.0
    %67 = vmatprep.subr.mxu0 0.0
    %68 = vmatpush1.msra.mxu0 0.0
    %69 = vmatprep.subr.mxu0 0.0
    %70 = vmatpush1.msra.mxu0 0.0
    %71 = vmatprep.subr.mxu0 0.0
    %72 = vmatpush1.msra.mxu0 0.0
    %73 = vmatprep.subr.mxu0 0.0
    %74 = vmatpush1.msra.mxu0 0.0
    %75 = vmatprep.subr.mxu0 0.0
    %76 = vmatpush1.msra.mxu0 0.0
    %77 = vmatprep.subr.mxu0 0.0
    %78 = vmatpush1.msra.mxu0 0.0
    %79 = vmatprep.subr.mxu0 0.0
    %80 = vmatpush1.msra.mxu0 0.0
    %81 = vmatprep.subr.mxu0 0.0
    %82 = vmatpush1.msra.mxu0 0.0
    %83 = vmatprep.subr.mxu0 0.0
    %84 = vmatpush1.msra.mxu0 0.0
    %85 = vmatprep.subr.mxu0 0.0
    %86 = vmatpush1.msra.mxu0 0.0
    %87 = vmatprep.subr.mxu0 0.0
    %88 = vmatpush1.msra.mxu0 0.0
    %89 = vmatprep.subr.mxu0 0.0
    %90 = vmatpush1.msra.mxu0 0.0
    %91 = vmatprep.subr.mxu0 0.0
    %92 = vmatpush1.msra.mxu0 0.0
    %93 = vmatprep.subr.mxu0 0.0
    %94 = vmatpush1.msra.mxu0 0.0
    %95 = vmatprep.subr.mxu0 0.0
    %96 = vmatpush1.msra.mxu0 0.0
    %97 = vmatprep.subr.mxu0 0.0
    %98 = vmatpush1.msra.mxu0 0.0
    %99 = vmatprep.subr.mxu0 0.0
    %100 = vmatpush1.msra.mxu0 0.0
    %101 = vmatprep.subr.mxu0 0.0
    %102 = vmatpush1.msra.mxu0 0.0
    %103 = vmatprep.subr.mxu0 0.0
    %104 = vmatpush1.msra.mxu0 0.0
    %105 = vmatprep.subr.mxu0 0.0
    %106 = vmatpush1.msra.mxu0 0.0
    %107 = vmatprep.subr.mxu0 0.0
    %108 = vmatpush1.msra.mxu0 0.0
    %109 = vmatprep.subr.mxu0 0.0
    %110 = vmatpush1.msra.mxu0 0.0
    %111 = vmatprep.mubr.f32.mxu0 0.0
    %112 = vmatmul.mubr.f32.gmra.mrb[0].mxu0 %v45
    %v113 = vpop.f32.mrb[0].mxu0
    %v114 = vadd.f32 %v41, %v113
    %v115 = vpop.f32.mrb[0].mxu0
    %116 = vdwg.mxu0
    %v117 = vmax.f32 %v114, 0.0
    %v118 = vld [vmem:[%s3] sm:$0xff]
    %v119 = vld [vmem:[%s3 + $0x8] sm:$0xff]
    %v120 = vld [vmem:[%s3 + $0x10] sm:$0xff]
    %v121 = vld [vmem:[%s3 + $0x18] sm:$0xff]
    %v122 = vld [vmem:[%s3 + $0x20] sm:$0xff]
    %v123 = vld [vmem:[%s3 + $0x28] sm:$0xff]
    %v124 = vld [vmem:[%s3 + $0x30] sm:$0xff]
    %v125 = vld [vmem:[%s3 + $0x38] sm:$0xff]
    %v126 = vld [vmem:[%s4] sm:$0x1]
    %v128 = vlaneseq
    %v129 = vshrl.u32 %v128, 7
    %v130 = vsub.s32 0, %v129
    %v131 = vrot.slane %v126, %v130
    %v134 = vsel %vm43, %v117, 0
    %136 = vmatprep.subr.mxu0 0.0
    %137 = vmatpush1.msra.mxu0 %v118
    %138 = vmatprep.subr.mxu0 0.0
    %139 = vmatpush1.msra.mxu0 %v119
    %140 = vmatprep.subr.mxu0 0.0
    %141 = vmatpush1.msra.mxu0 %v120
    %142 = vmatprep.subr.mxu0 0.0
    %143 = vmatpush1.msra.mxu0 %v121
    %144 = vmatprep.subr.mxu0 0.0
    %145 = vmatpush1.msra.mxu0 %v122
    %146 = vmatprep.subr.mxu0 0.0
    %147 = vmatpush1.msra.mxu0 %v123
    %148 = vmatprep.subr.mxu0 0.0
    %149 = vmatpush1.msra.mxu0 %v124
    %150 = vmatprep.subr.mxu0 0.0
    %151 = vmatpush1.msra.mxu0 %v125
    %152 = vmatprep.subr.mxu0 0.0
    %153 = vmatpush1.msra.mxu0 0.0
    %154 = vmatprep.subr.mxu0 0.0
    %155 = vmatpush1.msra.mxu0 0.0
    %156 = vmatprep.subr.mxu0 0.0
    %157 = vmatpush1.msra.mxu0 0.0
    %158 = vmatprep.subr.mxu0 0.0
    %159 = vmatpush1.msra.mxu0 0.0
    %160 = vmatprep.subr.mxu0 0.0
    %161 = vmatpush1.msra.mxu0 0.0
    %162 = vmatprep.subr.mxu0 0.0
    %163 = vmatpush1.msra.mxu0 0.0
    %164 = vmatprep.subr.mxu0 0.0
    %165 = vmatpush1.msra.mxu0 0.0
    %166 = vmatprep.subr.mxu0 0.0
    %167 = vmatpush1.msra.mxu0 0.0
    %168 = vmatprep.subr.mxu0 0.0
    %169 = vmatpush1.msra.mxu0 0.0
    %170 = vmatprep.subr.mxu0 0.0
    %171 = vmatpush1.msra.mxu0 0.0
    %172 = vmatprep.subr.mxu0 0.0
    %173 = vmatpush1.msra.mxu0 0.0
    %174 = vmatprep.subr.mxu0 0.0
    %175 = vmatpush1.msra.mxu0 0.0
    %176 = vmatprep.subr.mxu0 0.0
    %177 = vmatpush1.msra.mxu0 0.0
    %178 = vmatprep.subr.mxu0 0.0
    %179 = vmatpush1.msra.mxu0 0.0
    %180 = vmatprep.subr.mxu0 0.0
    %181 = vmatpush1.msra.mxu0 0.0
    %182 = vmatprep.subr.mxu0 0.0
    %183 = vmatpush1.msra.mxu0 0.0
    %184 = vmatprep.subr.mxu0 0.0
    %185 = vmatpush1.msra.mxu0 0.0
    %186 = vmatprep.subr.mxu0 0.0
    %187 = vmatpush1.msra.mxu0 0.0
    %188 = vmatprep.subr.mxu0 0.0
    %189 = vmatpush1.msra.mxu0 0.0
    %190 = vmatprep.subr.mxu0 0.0
    %191 = vmatpush1.msra.mxu0 0.0
    %192 = vmatprep.subr.mxu0 0.0
    %193 = vmatpush1.msra.mxu0 0.0
    %194 = vmatprep.subr.mxu0 0.0
    %195 = vmatpush1.msra.mxu0 0.0
    %196 = vmatprep.subr.mxu0 0.0
    %197 = vmatpush1.msra.mxu0 0.0
    %198 = vmatprep.subr.mxu0 0.0
    %199 = vmatpush1.msra.mxu0 0.0
    %200 = vmatprep.mubr.f32.mxu0 0.0
    %201 = vmatmul.mubr.f32.gmra.mrb[0].mxu0 %v134
    %v202 = vpop.f32.mrb[0].mxu0
    %v203 = vadd.f32 %v131, %v202
    %v204 = vpop.f32.mrb[0].mxu0
    %205 = vdwg.mxu0
    %v206 = vmax.f32 %v203, 0.0
    %v207 = vld [vmem:[%s5] sm:$0xff]
    %v208 = vld [vmem:[%s5 + $0x8] sm:$0xff]
    %v209 = vld [vmem:[%s5 + $0x10] sm:$0xff]
    %v210 = vld [vmem:[%s5 + $0x18] sm:$0xff]
    %v211 = vld [vmem:[%s6] sm:$0x1]
    %v213 = vlaneseq
    %v214 = vshrl.u32 %v213, 7
    %v215 = vsub.s32 0, %v214
    %v216 = vrot.slane %v211, %v215
    %vm218 = vcmask 261120
    %v220 = vsel %vm218, %v206, 0
    %222 = vmatprep.subr.mxu0 0.0
    %223 = vmatpush1.msra.mxu0 %v207
    %224 = vmatprep.subr.mxu0 0.0
    %225 = vmatpush1.msra.mxu0 %v208
    %226 = vmatprep.subr.mxu0 0.0
    %227 = vmatpush1.msra.mxu0 %v209
    %228 = vmatprep.subr.mxu0 0.0
    %229 = vmatpush1.msra.mxu0 %v210
    %230 = vmatprep.subr.mxu0 0.0
    %231 = vmatpush1.msra.mxu0 0.0
    %232 = vmatprep.subr.mxu0 0.0
    %233 = vmatpush1.msra.mxu0 0.0
    %234 = vmatprep.subr.mxu0 0.0
    %235 = vmatpush1.msra.mxu0 0.0
    %236 = vmatprep.subr.mxu0 0.0
    %237 = vmatpush1.msra.mxu0 0.0
    %238 = vmatprep.subr.mxu0 0.0
    %239 = vmatpush1.msra.mxu0 0.0
    %240 = vmatprep.subr.mxu0 0.0
    %241 = vmatpush1.msra.mxu0 0.0
    %242 = vmatprep.subr.mxu0 0.0
    %243 = vmatpush1.msra.mxu0 0.0
    %244 = vmatprep.subr.mxu0 0.0
    %245 = vmatpush1.msra.mxu0 0.0
    %246 = vmatprep.subr.mxu0 0.0
    %247 = vmatpush1.msra.mxu0 0.0
    %248 = vmatprep.subr.mxu0 0.0
    %249 = vmatpush1.msra.mxu0 0.0
    %250 = vmatprep.subr.mxu0 0.0
    %251 = vmatpush1.msra.mxu0 0.0
    %252 = vmatprep.subr.mxu0 0.0
    %253 = vmatpush1.msra.mxu0 0.0
    %254 = vmatprep.subr.mxu0 0.0
    %255 = vmatpush1.msra.mxu0 0.0
    %256 = vmatprep.subr.mxu0 0.0
    %257 = vmatpush1.msra.mxu0 0.0
    %258 = vmatprep.subr.mxu0 0.0
    %259 = vmatpush1.msra.mxu0 0.0
    %260 = vmatprep.subr.mxu0 0.0
    %261 = vmatpush1.msra.mxu0 0.0
    %262 = vmatprep.subr.mxu0 0.0
    %263 = vmatpush1.msra.mxu0 0.0
    %264 = vmatprep.subr.mxu0 0.0
    %265 = vmatpush1.msra.mxu0 0.0
    %266 = vmatprep.subr.mxu0 0.0
    %267 = vmatpush1.msra.mxu0 0.0
    %268 = vmatprep.subr.mxu0 0.0
    %269 = vmatpush1.msra.mxu0 0.0
    %270 = vmatprep.subr.mxu0 0.0
    %271 = vmatpush1.msra.mxu0 0.0
    %272 = vmatprep.subr.mxu0 0.0
    %273 = vmatpush1.msra.mxu0 0.0
    %274 = vmatprep.subr.mxu0 0.0
    %275 = vmatpush1.msra.mxu0 0.0
    %276 = vmatprep.subr.mxu0 0.0
    %277 = vmatpush1.msra.mxu0 0.0
    %278 = vmatprep.subr.mxu0 0.0
    %279 = vmatpush1.msra.mxu0 0.0
    %280 = vmatprep.subr.mxu0 0.0
    %281 = vmatpush1.msra.mxu0 0.0
    %282 = vmatprep.subr.mxu0 0.0
    %283 = vmatpush1.msra.mxu0 0.0
    %284 = vmatprep.subr.mxu0 0.0
    %285 = vmatpush1.msra.mxu0 0.0
    %286 = vmatprep.mubr.f32.mxu0 0.0
    %287 = vmatmul.mubr.f32.gmra.mrb[0].mxu0 %v220
    %v288 = vpop.f32.mrb[0].mxu0
    %v289 = vadd.f32 %v216, %v288
    %v290 = vpop.f32.mrb[0].mxu0
    %291 = vdwg.mxu0
    %vm292 = vcmask 25600
    %293 = vst.msk [vmem:[#allocation2] sm:$0x3] %vm292, %v289
    // Predicated region
    $region30: #{gat_edge_model_forward.9} parent=1 // pred_check
      _
    $region31: #{gat_edge_model_forward.9} parent=1 // pred_check_branch
      %295 = sbr.rel (0) target = $region33
    $region32: #{gat_edge_model_forward.9} parent=1 // pred_region
      %s297 = ssub.s32 32, 32
      %298 = vsyncadd [#allocation3], %s297
      %s300 = sshll.u32 [#allocation2], 4
      %s301 = int_to_ptr.vmem [resolvable:$true] %s300
      %303 = dma.vmem_to_hbm [thread:$0]  %s301, 32, %s7, [#allocation3]
    $region33: #{gat_edge_model_forward.9} parent=1 // pred_fallthru
      _
    // Predicated region
    $region34: #{gat_edge_model_forward.9} parent=1 // pred_check
      _
    $region35: #{gat_edge_model_forward.9} parent=1 // pred_check_branch
      %305 = sbr.rel (0) target = $region37
    $region36: #{gat_edge_model_forward.9} parent=1 // pred_region
      %306 = dma.done [#allocation3], 32
    $region37: #{gat_edge_model_forward.9} parent=1 // pred_fallthru
      _
    %307 = vsyncpa [#allocation3], 1

</llo_original>
